<compile_context>
chip_gen: v7x
topology: tpu7x:2x2x1
jax: 0.10.0
libtpu: 0.0.40
codegen_flags: <defaults>
</compile_context>

<pallas_src>
import jax
import jax.numpy as jnp
from jax.experimental import pallas as pl
from jax.experimental.pallas import tpu as pltpu


def _default_compute_dtype():
    """bf16 pixel chain on v6e/v7x (bf16 VPU/EUP); f32 on v5e and older."""
    try:
        kind = jax.devices()[0].device_kind.lower()
    except Exception:
        return jnp.float32
    if "v6" in kind or "v7" in kind:
        return jnp.bfloat16
    return jnp.float32


def _prompt_attn_kernel(feats_ref, amat_ref, avec_ref, wov_ref, bo_ref, out_ref):
    feats = feats_ref[0]                      # [C, tHW] f32, HW on the lane axis
    amat = amat_ref[0]                        # [M, C]   compute dtype
    avec = avec_ref[0]                        # [M, 1]   compute dtype
    wov = wov_ref[0]                          # [C, M]   compute dtype
    cdt = amat.dtype

    x = feats.astype(cdt)                     # no-op when cdt == f32
    c_dim = x.shape[0]
    m_dim = amat.shape[0]

    # s[m, hw] = sum_c A[m, c] * x[c, hw] + a[m]
    # (Wq and 1/sqrt(P) already folded into A / a in the wrapper.)
    # Tiny contraction (C=4) -> unrolled VPU broadcast-FMAs, HW stays on lanes.
    s = amat[:, 0:1] * x[0:1, :]
    for c in range(1, c_dim):
        s = s + amat[:, c:c + 1] * x[c:c + 1, :]
    s = s + avec                              # [M, tHW]

    # Numerically-stable softmax over the M prompt tokens (sublane axis -> XLU).
    mmax = jnp.max(s, axis=0, keepdims=True)
    e = jnp.exp(s - mmax)                     # [M, tHW]
    denom = jnp.sum(e, axis=0, keepdims=True)  # [1, tHW]

    # o[c, hw] = sum_m WoV[c, m] * e[m, hw]   (Wo folded into V in the wrapper;
    # normalization deferred to the f32 epilogue below: C rows < M rows).
    o = wov[:, 0:1] * e[0:1, :]
    for m in range(1, m_dim):
        o = o + wov[:, m:m + 1] * e[m:m + 1, :]   # [C, tHW]

    inv = pl.reciprocal(denom.astype(jnp.float32), approx=True)   # EUP slot
    out_ref[0] = o.astype(jnp.float32) * inv + bo_ref[...] + feats


def _pick_hw_tile(hw, batch, *, channels, tokens, itemsize_c,
                  max_tile=32768, vmem_budget=24 * 1024 * 1024, min_grid=2):
    """Lane-dense HW tile.

    * Full HW when it fits one (large) tile, otherwise a fixed multiple of 128
      (the cdiv grid handles the ragged last block) so the ~0.35 us per-step
      overhead is amortized.
    * Keep >= `min_grid` total grid steps when cheap so v7x's two TensorCores
      both get work under dimension_semantics=("parallel", "parallel").
    * Explicit VMEM formula (v7x has only 64 MiB physical) instead of the old
      full-HW fallback that could blow the budget.
    """
    def vmem_bytes(t):
        blocks = 2 * 2 * channels * t * 4                    # dbuf'd feats-in + out (f32)
        interm = 2 * (tokens + channels) * t * itemsize_c    # s, e, x, o
        interm += 4 * t * 4                                  # max / denom / inv rows
        return blocks + interm

    t = hw if hw <= max_tile else max_tile
    if batch * pl.cdiv(hw, t) < min_grid and hw >= 2 * 128:
        t = pl.cdiv(pl.cdiv(hw, 2), 128) * 128               # split so grid >= 2 (v7x)
    while t > 128 and vmem_bytes(t) > vmem_budget:
        t = max(128, pl.cdiv(t // 2, 128) * 128)
    return t


def prompt_attention(feats_nchw, prompt_tokens, params, *, prompt_dim,
                     compute_dtype=None):
    """feats_nchw: [B, C, H, W] float32, prompt_tokens: [B, M, P] float32."""
    B, C, H, W = feats_nchw.shape
    M = prompt_tokens.shape[1]
    P = prompt_dim
    HW = H * W
    if compute_dtype is None:
        compute_dtype = _default_compute_dtype()

    wq, bq, wk, bk, wv, bv, wo, bo = params
    scale = 1.0 / float(P) ** 0.5

    # ---- Per-batch token-side algebra, fused in plain XLA (tiny M x P work).
    K = prompt_tokens @ wk.T + bk                                   # [B, M, P]
    V = prompt_tokens @ wv.T + bv                                   # [B, M, P]
    amat = (scale * jnp.einsum('bmp,pc->bmc', K, wq)).astype(compute_dtype)        # [B, M, C]
    avec = (scale * jnp.einsum('bmp,p->bm', K, bq))[..., None].astype(compute_dtype)  # [B, M, 1]
    wov = jnp.einsum('cp,bmp->bcm', wo, V).astype(compute_dtype)                   # [B, C, M]
    bo2 = bo.reshape(C, 1).astype(jnp.float32)

    # Free reshape only — no NCHW<->NHWC relayout pass; HW lands on lanes.
    feats_cf = feats_nchw.reshape(B, C, HW)

    t_hw = _pick_hw_tile(HW, B, channels=C, tokens=M,
                         itemsize_c=jnp.dtype(compute_dtype).itemsize)
    n_t = pl.cdiv(HW, t_hw)

    out_cf = pl.pallas_call(
        _prompt_attn_kernel,
        out_shape=jax.ShapeDtypeStruct((B, C, HW), jnp.float32),
        grid_spec=pltpu.PrefetchScalarGridSpec(
            num_scalar_prefetch=0,
            grid=(B, n_t),
            in_specs=[
                pl.BlockSpec((1, C, t_hw), lambda b, t: (b, 0, t)),   # feats tile
                pl.BlockSpec((1, M, C), lambda b, t: (b, 0, 0)),      # A   = scale*K@Wq
                pl.BlockSpec((1, M, 1), lambda b, t: (b, 0, 0)),      # a   = scale*K@bq
                pl.BlockSpec((1, C, M), lambda b, t: (b, 0, 0)),      # WoV = Wo@V^T
                pl.BlockSpec((C, 1), lambda b, t: (0, 0)),            # bo
            ],
            out_specs=pl.BlockSpec((1, C, t_hw), lambda b, t: (b, 0, t)),
        ),
        compiler_params=pltpu.CompilerParams(
            dimension_semantics=("parallel", "parallel"),
            vmem_limit_bytes=32 * 1024 * 1024),
    )(feats_cf, amat, avec, wov, bo2)

    # Free reshape back to NCHW.
    return out_cf.reshape(B, C, H, W)


def _reference(feats_nchw, prompt_tokens, params, *, prompt_dim):
    """Pure-JAX reference mirroring the PyTorch forward."""
    wq, bq, wk, bk, wv, bv, wo, bo = params
    B, C, H, W = feats_nchw.shape
    q = jnp.einsum('bchw,pc->bhwp', feats_nchw, wq) + bq
    q = q.reshape(B, H * W, prompt_dim)
    k = prompt_tokens @ wk.T + bk
    v = prompt_tokens @ wv.T + bv
    attn = jax.nn.softmax(jnp.einsum('bqp,bmp->bqm', q, k) / prompt_dim ** 0.5, axis=-1)
    o = jnp.einsum('bqm,bmp->bqp', attn, v)                     # [B, HW, P]
    o = o.reshape(B, H, W, prompt_dim)
    o = jnp.einsum('bhwp,cp->bchw', o, wo) + bo[None, :, None, None]
    return feats_nchw + o


if __name__ == "__main__":
    B, C, H, W = 2, 4, 16, 16          # in_channels = 4
    P = 8                              # prompt_dim
    M = 8                              # number of prompt tokens
    # num_heads = 4  (declared in the module but unused by forward())

    key = jax.random.PRNGKey(0)
    keys = jax.random.split(key, 10)

    feats = jax.random.normal(keys[0], (B, C, H, W), jnp.float32)
    prompt_tokens = jax.random.normal(keys[1], (B, M, P), jnp.float32)

    # Deterministic synthetic parameters (shapes from the module's __init__).
    wq = 0.1 * jax.random.normal(keys[2], (P, C), jnp.float32)   # Conv2d(C, P, 1) weight
    bq = 0.1 * jax.random.normal(keys[3], (P,), jnp.float32)
    wk = 0.1 * jax.random.normal(keys[4], (P, P), jnp.float32)   # Linear(P, P)
    bk = 0.1 * jax.random.normal(keys[5], (P,), jnp.float32)
    wv = 0.1 * jax.random.normal(keys[6], (P, P), jnp.float32)   # Linear(P, P)
    bv = 0.1 * jax.random.normal(keys[7], (P,), jnp.float32)
    wo = 0.1 * jax.random.normal(keys[8], (C, P), jnp.float32)   # Conv2d(P, C, 1) weight
    bo = 0.1 * jax.random.normal(keys[9], (C,), jnp.float32)
    params = (wq, bq, wk, bk, wv, bv, wo, bo)

    try:
        out = prompt_attention(feats, prompt_tokens, params, prompt_dim=P)
        out = jax.block_until_ready(out)
    except Exception:
        # Robustness: if this Mosaic build lacks a packed-bf16 lowering for the
        # pixel chain, fall back to the known-good f32 chain.
        out = prompt_attention(feats, prompt_tokens, params, prompt_dim=P,
                               compute_dtype=jnp.float32)
        out = jax.block_until_ready(out)

    ref = _reference(feats, prompt_tokens, params, prompt_dim=P)
    assert out.shape == (B, C, H, W)
    assert jnp.allclose(out, ref, rtol=2e-2, atol=2e-2), "mismatch vs reference"

    print("KERNEL_OK")
</pallas_src>

<mosaic_0001>
module attributes {stable_mosaic.version = 11 : i64} {
  func.func @_prompt_attn_kernel(%arg0: i32, %arg1: i32, %arg2: memref<1x4x256xf32, #tpu.memory_space<vmem>>, %arg3: memref<1x8x4xf32, #tpu.memory_space<vmem>>, %arg4: memref<1x8x1xf32, #tpu.memory_space<vmem>>, %arg5: memref<1x4x8xf32, #tpu.memory_space<vmem>>, %arg6: memref<4x1xf32, #tpu.memory_space<vmem>>, %arg7: memref<1x4x256xf32, #tpu.memory_space<vmem>>) attributes {dimension_semantics = [#tpu.dimension_semantics<parallel>, #tpu.dimension_semantics<parallel>], iteration_bounds = array<i64: 2, 1>, scalar_prefetch = 0 : i64, scratch_operands = 0 : i64, tpu.core_type = #tpu.core_type<tc>, window_params = [{transform_indices = @transform_0, window_bounds = array<i64: 1, 4, 256>}, {transform_indices = @transform_1, window_bounds = array<i64: 1, 8, 4>}, {transform_indices = @transform_2, window_bounds = array<i64: 1, 8, 1>}, {transform_indices = @transform_3, window_bounds = array<i64: 1, 4, 8>}, {pipeline_mode = #tpu.pipeline_mode<synchronous>, transform_indices = @transform_4, window_bounds = array<i64: 4, 1>}, {transform_indices = @transform_5, window_bounds = array<i64: 1, 4, 256>}]} {
    %c0 = arith.constant 0 : index
    %c0_0 = arith.constant 0 : index
    %c0_1 = arith.constant 0 : index
    %0 = vector.load %arg2[%c0, %c0_0, %c0_1] : memref<1x4x256xf32, #tpu.memory_space<vmem>>, vector<1x4x256xf32>
    %1 = vector.shape_cast %0 : vector<1x4x256xf32> to vector<4x256xf32>
    %c0_2 = arith.constant 0 : index
    %c0_3 = arith.constant 0 : index
    %c0_4 = arith.constant 0 : index
    %2 = vector.load %arg3[%c0_2, %c0_3, %c0_4] : memref<1x8x4xf32, #tpu.memory_space<vmem>>, vector<1x8x4xf32>
    %3 = vector.shape_cast %2 : vector<1x8x4xf32> to vector<8x4xf32>
    %c0_5 = arith.constant 0 : index
    %c0_6 = arith.constant 0 : index
    %c0_7 = arith.constant 0 : index
    %4 = vector.load %arg4[%c0_5, %c0_6, %c0_7] : memref<1x8x1xf32, #tpu.memory_space<vmem>>, vector<1x8x1xf32>
    %5 = vector.shape_cast %4 : vector<1x8x1xf32> to vector<8x1xf32>
    %c0_8 = arith.constant 0 : index
    %c0_9 = arith.constant 0 : index
    %c0_10 = arith.constant 0 : index
    %6 = vector.load %arg5[%c0_8, %c0_9, %c0_10] : memref<1x4x8xf32, #tpu.memory_space<vmem>>, vector<1x4x8xf32>
    %7 = vector.shape_cast %6 : vector<1x4x8xf32> to vector<4x8xf32>
    %8 = vector.extract_strided_slice %3 {offsets = [0, 0], sizes = [8, 1], strides = [1, 1]} : vector<8x4xf32> to vector<8x1xf32>
    %9 = vector.extract_strided_slice %1 {offsets = [0, 0], sizes = [1, 256], strides = [1, 1]} : vector<4x256xf32> to vector<1x256xf32>
    %10 = vector.broadcast %8 : vector<8x1xf32> to vector<8x256xf32>
    %11 = vector.broadcast %9 : vector<1x256xf32> to vector<8x256xf32>
    %12 = arith.mulf %10, %11 : vector<8x256xf32>
    %13 = vector.extract_strided_slice %3 {offsets = [0, 1], sizes = [8, 1], strides = [1, 1]} : vector<8x4xf32> to vector<8x1xf32>
    %14 = vector.extract_strided_slice %1 {offsets = [1, 0], sizes = [1, 256], strides = [1, 1]} : vector<4x256xf32> to vector<1x256xf32>
    %15 = vector.broadcast %13 : vector<8x1xf32> to vector<8x256xf32>
    %16 = vector.broadcast %14 : vector<1x256xf32> to vector<8x256xf32>
    %17 = arith.mulf %15, %16 : vector<8x256xf32>
    %18 = arith.addf %12, %17 : vector<8x256xf32>
    %19 = vector.extract_strided_slice %3 {offsets = [0, 2], sizes = [8, 1], strides = [1, 1]} : vector<8x4xf32> to vector<8x1xf32>
    %20 = vector.extract_strided_slice %1 {offsets = [2, 0], sizes = [1, 256], strides = [1, 1]} : vector<4x256xf32> to vector<1x256xf32>
    %21 = vector.broadcast %19 : vector<8x1xf32> to vector<8x256xf32>
    %22 = vector.broadcast %20 : vector<1x256xf32> to vector<8x256xf32>
    %23 = arith.mulf %21, %22 : vector<8x256xf32>
    %24 = arith.addf %18, %23 : vector<8x256xf32>
    %25 = vector.extract_strided_slice %3 {offsets = [0, 3], sizes = [8, 1], strides = [1, 1]} : vector<8x4xf32> to vector<8x1xf32>
    %26 = vector.extract_strided_slice %1 {offsets = [3, 0], sizes = [1, 256], strides = [1, 1]} : vector<4x256xf32> to vector<1x256xf32>
    %27 = vector.broadcast %25 : vector<8x1xf32> to vector<8x256xf32>
    %28 = vector.broadcast %26 : vector<1x256xf32> to vector<8x256xf32>
    %29 = arith.mulf %27, %28 : vector<8x256xf32>
    %30 = arith.addf %24, %29 : vector<8x256xf32>
    %31 = vector.broadcast %5 : vector<8x1xf32> to vector<8x256xf32>
    %32 = arith.addf %30, %31 : vector<8x256xf32>
    %cst = arith.constant dense<0xFF800000> : vector<256xf32>
    %33 = vector.multi_reduction <maximumf>, %32, %cst [0] : vector<8x256xf32> to vector<256xf32>
    %34 = vector.shape_cast %33 : vector<256xf32> to vector<1x256xf32>
    %35 = vector.broadcast %34 : vector<1x256xf32> to vector<8x256xf32>
    %36 = arith.subf %32, %35 : vector<8x256xf32>
    %37 = math.exp %36 : vector<8x256xf32>
    %cst_11 = arith.constant dense<0.000000e+00> : vector<256xf32>
    %38 = vector.multi_reduction <add>, %37, %cst_11 [0] : vector<8x256xf32> to vector<256xf32>
    %39 = vector.shape_cast %38 : vector<256xf32> to vector<1x256xf32>
    %40 = vector.extract_strided_slice %7 {offsets = [0, 0], sizes = [4, 1], strides = [1, 1]} : vector<4x8xf32> to vector<4x1xf32>
    %41 = vector.extract_strided_slice %37 {offsets = [0, 0], sizes = [1, 256], strides = [1, 1]} : vector<8x256xf32> to vector<1x256xf32>
    %42 = vector.broadcast %40 : vector<4x1xf32> to vector<4x256xf32>
    %43 = vector.broadcast %41 : vector<1x256xf32> to vector<4x256xf32>
    %44 = arith.mulf %42, %43 : vector<4x256xf32>
    %45 = vector.extract_strided_slice %7 {offsets = [0, 1], sizes = [4, 1], strides = [1, 1]} : vector<4x8xf32> to vector<4x1xf32>
    %46 = vector.extract_strided_slice %37 {offsets = [1, 0], sizes = [1, 256], strides = [1, 1]} : vector<8x256xf32> to vector<1x256xf32>
    %47 = vector.broadcast %45 : vector<4x1xf32> to vector<4x256xf32>
    %48 = vector.broadcast %46 : vector<1x256xf32> to vector<4x256xf32>
    %49 = arith.mulf %47, %48 : vector<4x256xf32>
    %50 = arith.addf %44, %49 : vector<4x256xf32>
    %51 = vector.extract_strided_slice %7 {offsets = [0, 2], sizes = [4, 1], strides = [1, 1]} : vector<4x8xf32> to vector<4x1xf32>
    %52 = vector.extract_strided_slice %37 {offsets = [2, 0], sizes = [1, 256], strides = [1, 1]} : vector<8x256xf32> to vector<1x256xf32>
    %53 = vector.broadcast %51 : vector<4x1xf32> to vector<4x256xf32>
    %54 = vector.broadcast %52 : vector<1x256xf32> to vector<4x256xf32>
    %55 = arith.mulf %53, %54 : vector<4x256xf32>
    %56 = arith.addf %50, %55 : vector<4x256xf32>
    %57 = vector.extract_strided_slice %7 {offsets = [0, 3], sizes = [4, 1], strides = [1, 1]} : vector<4x8xf32> to vector<4x1xf32>
    %58 = vector.extract_strided_slice %37 {offsets = [3, 0], sizes = [1, 256], strides = [1, 1]} : vector<8x256xf32> to vector<1x256xf32>
    %59 = vector.broadcast %57 : vector<4x1xf32> to vector<4x256xf32>
    %60 = vector.broadcast %58 : vector<1x256xf32> to vector<4x256xf32>
    %61 = arith.mulf %59, %60 : vector<4x256xf32>
    %62 = arith.addf %56, %61 : vector<4x256xf32>
    %63 = vector.extract_strided_slice %7 {offsets = [0, 4], sizes = [4, 1], strides = [1, 1]} : vector<4x8xf32> to vector<4x1xf32>
    %64 = vector.extract_strided_slice %37 {offsets = [4, 0], sizes = [1, 256], strides = [1, 1]} : vector<8x256xf32> to vector<1x256xf32>
    %65 = vector.broadcast %63 : vector<4x1xf32> to vector<4x256xf32>
    %66 = vector.broadcast %64 : vector<1x256xf32> to vector<4x256xf32>
    %67 = arith.mulf %65, %66 : vector<4x256xf32>
    %68 = arith.addf %62, %67 : vector<4x256xf32>
    %69 = vector.extract_strided_slice %7 {offsets = [0, 5], sizes = [4, 1], strides = [1, 1]} : vector<4x8xf32> to vector<4x1xf32>
    %70 = vector.extract_strided_slice %37 {offsets = [5, 0], sizes = [1, 256], strides = [1, 1]} : vector<8x256xf32> to vector<1x256xf32>
    %71 = vector.broadcast %69 : vector<4x1xf32> to vector<4x256xf32>
    %72 = vector.broadcast %70 : vector<1x256xf32> to vector<4x256xf32>
    %73 = arith.mulf %71, %72 : vector<4x256xf32>
    %74 = arith.addf %68, %73 : vector<4x256xf32>
    %75 = vector.extract_strided_slice %7 {offsets = [0, 6], sizes = [4, 1], strides = [1, 1]} : vector<4x8xf32> to vector<4x1xf32>
    %76 = vector.extract_strided_slice %37 {offsets = [6, 0], sizes = [1, 256], strides = [1, 1]} : vector<8x256xf32> to vector<1x256xf32>
    %77 = vector.broadcast %75 : vector<4x1xf32> to vector<4x256xf32>
    %78 = vector.broadcast %76 : vector<1x256xf32> to vector<4x256xf32>
    %79 = arith.mulf %77, %78 : vector<4x256xf32>
    %80 = arith.addf %74, %79 : vector<4x256xf32>
    %81 = vector.extract_strided_slice %7 {offsets = [0, 7], sizes = [4, 1], strides = [1, 1]} : vector<4x8xf32> to vector<4x1xf32>
    %82 = vector.extract_strided_slice %37 {offsets = [7, 0], sizes = [1, 256], strides = [1, 1]} : vector<8x256xf32> to vector<1x256xf32>
    %83 = vector.broadcast %81 : vector<4x1xf32> to vector<4x256xf32>
    %84 = vector.broadcast %82 : vector<1x256xf32> to vector<4x256xf32>
    %85 = arith.mulf %83, %84 : vector<4x256xf32>
    %86 = arith.addf %80, %85 : vector<4x256xf32>
    %87 = tpu.reciprocal %39 {approx = true} : vector<1x256xf32> -> vector<1x256xf32>
    %88 = vector.broadcast %87 : vector<1x256xf32> to vector<4x256xf32>
    %89 = arith.mulf %86, %88 : vector<4x256xf32>
    %c0_12 = arith.constant 0 : index
    %c0_13 = arith.constant 0 : index
    %90 = vector.load %arg6[%c0_12, %c0_13] : memref<4x1xf32, #tpu.memory_space<vmem>>, vector<4x1xf32>
    %91 = vector.broadcast %90 : vector<4x1xf32> to vector<4x256xf32>
    %92 = arith.addf %89, %91 : vector<4x256xf32>
    %93 = arith.addf %92, %1 : vector<4x256xf32>
    %c0_14 = arith.constant 0 : index
    %c0_15 = arith.constant 0 : index
    %c0_16 = arith.constant 0 : index
    %94 = vector.load %arg7[%c0_14, %c0_15, %c0_16] : memref<1x4x256xf32, #tpu.memory_space<vmem>>, vector<1x4x256xf32>
    %95 = vector.shape_cast %94 : vector<1x4x256xf32> to vector<4x256xf32>
    %96 = vector.shape_cast %93 : vector<4x256xf32> to vector<1x4x256xf32>
    tpu.vector_store %arg7[%c0_14, %c0_15, %c0_16], %96 {strides = array<i32>} : memref<1x4x256xf32, #tpu.memory_space<vmem>>, vector<1x4x256xf32>,
    return
  }
  func.func @transform_0(%arg0: i32, %arg1: i32) -> (i32, i32, i32) {
    %c0_i32 = arith.constant 0 : i32
    %c0_i32_0 = arith.constant 0 : i32
    return %arg0, %c0_i32, %arg1 : i32, i32, i32
  }
  func.func @transform_1(%arg0: i32, %arg1: i32) -> (i32, i32, i32) {
    %c0_i32 = arith.constant 0 : i32
    %c0_i32_0 = arith.constant 0 : i32
    %c0_i32_1 = arith.constant 0 : i32
    return %arg0, %c0_i32, %c0_i32_0 : i32, i32, i32
  }
  func.func @transform_2(%arg0: i32, %arg1: i32) -> (i32, i32, i32) {
    %c0_i32 = arith.constant 0 : i32
    %c0_i32_0 = arith.constant 0 : i32
    %c0_i32_1 = arith.constant 0 : i32
    return %arg0, %c0_i32, %c0_i32_0 : i32, i32, i32
  }
  func.func @transform_3(%arg0: i32, %arg1: i32) -> (i32, i32, i32) {
    %c0_i32 = arith.constant 0 : i32
    %c0_i32_0 = arith.constant 0 : i32
    %c0_i32_1 = arith.constant 0 : i32
    return %arg0, %c0_i32, %c0_i32_0 : i32, i32, i32
  }
  func.func @transform_4(%arg0: i32, %arg1: i32) -> (i32, i32) {
    %c0_i32 = arith.constant 0 : i32
    %c0_i32_0 = arith.constant 0 : i32
    %c0_i32_1 = arith.constant 0 : i32
    return %c0_i32, %c0_i32_0 : i32, i32
  }
  func.func @transform_5(%arg0: i32, %arg1: i32) -> (i32, i32, i32) {
    %c0_i32 = arith.constant 0 : i32
    %c0_i32_0 = arith.constant 0 : i32
    return %arg0, %c0_i32, %arg1 : i32, i32, i32
  }
}

module attributes {stable_mosaic.version = 11 : i64} {
  func.func @_prompt_attn_kernel(%arg0: i32, %arg1: i32, %arg2: memref<1x4x256xf32, #tpu.memory_space<vmem>>, %arg3: memref<1x8x4xf32, #tpu.memory_space<vmem>>, %arg4: memref<1x8x1xf32, #tpu.memory_space<vmem>>, %arg5: memref<1x4x8xf32, #tpu.memory_space<vmem>>, %arg6: memref<4x1xf32, #tpu.memory_space<vmem>>, %arg7: memref<1x4x256xf32, #tpu.memory_space<vmem>>) attributes {dimension_semantics = [#tpu.dimension_semantics<parallel>, #tpu.dimension_semantics<parallel>], iteration_bounds = array<i64: 2, 1>, scalar_prefetch = 0 : i64, scratch_operands = 0 : i64, tpu.core_type = #tpu.core_type<tc>, window_params = [{transform_indices = @transform_0, window_bounds = array<i64: 1, 4, 256>}, {transform_indices = @transform_1, window_bounds = array<i64: 1, 8, 4>}, {transform_indices = @transform_2, window_bounds = array<i64: 1, 8, 1>}, {transform_indices = @transform_3, window_bounds = array<i64: 1, 4, 8>}, {pipeline_mode = #tpu.pipeline_mode<synchronous>, transform_indices = @transform_4, window_bounds = array<i64: 4, 1>}, {transform_indices = @transform_5, window_bounds = array<i64: 1, 4, 256>}]} {
    %c0 = arith.constant 0 : index
    %c0_0 = arith.constant 0 : index
    %c0_1 = arith.constant 0 : index
    %0 = vector.load %arg2[%c0, %c0_0, %c0_1] : memref<1x4x256xf32, #tpu.memory_space<vmem>>, vector<1x4x256xf32>
    %1 = vector.shape_cast %0 : vector<1x4x256xf32> to vector<4x256xf32>
    %c0_2 = arith.constant 0 : index
    %c0_3 = arith.constant 0 : index
    %c0_4 = arith.constant 0 : index
    %2 = vector.load %arg3[%c0_2, %c0_3, %c0_4] : memref<1x8x4xf32, #tpu.memory_space<vmem>>, vector<1x8x4xf32>
    %3 = vector.shape_cast %2 : vector<1x8x4xf32> to vector<8x4xf32>
    %c0_5 = arith.constant 0 : index
    %c0_6 = arith.constant 0 : index
    %c0_7 = arith.constant 0 : index
    %4 = vector.load %arg4[%c0_5, %c0_6, %c0_7] : memref<1x8x1xf32, #tpu.memory_space<vmem>>, vector<1x8x1xf32>
    %5 = vector.shape_cast %4 : vector<1x8x1xf32> to vector<8x1xf32>
    %c0_8 = arith.constant 0 : index
    %c0_9 = arith.constant 0 : index
    %c0_10 = arith.constant 0 : index
    %6 = vector.load %arg5[%c0_8, %c0_9, %c0_10] : memref<1x4x8xf32, #tpu.memory_space<vmem>>, vector<1x4x8xf32>
    %7 = vector.shape_cast %6 : vector<1x4x8xf32> to vector<4x8xf32>
    %8 = vector.extract_strided_slice %3 {offsets = [0, 0], sizes = [8, 1], strides = [1, 1]} : vector<8x4xf32> to vector<8x1xf32>
    %9 = vector.extract_strided_slice %1 {offsets = [0, 0], sizes = [1, 256], strides = [1, 1]} : vector<4x256xf32> to vector<1x256xf32>
    %10 = vector.broadcast %8 : vector<8x1xf32> to vector<8x256xf32>
    %11 = vector.broadcast %9 : vector<1x256xf32> to vector<8x256xf32>
    %12 = arith.mulf %10, %11 : vector<8x256xf32>
    %13 = vector.extract_strided_slice %3 {offsets = [0, 1], sizes = [8, 1], strides = [1, 1]} : vector<8x4xf32> to vector<8x1xf32>
    %14 = vector.extract_strided_slice %1 {offsets = [1, 0], sizes = [1, 256], strides = [1, 1]} : vector<4x256xf32> to vector<1x256xf32>
    %15 = vector.broadcast %13 : vector<8x1xf32> to vector<8x256xf32>
    %16 = vector.broadcast %14 : vector<1x256xf32> to vector<8x256xf32>
    %17 = arith.mulf %15, %16 : vector<8x256xf32>
    %18 = arith.addf %12, %17 : vector<8x256xf32>
    %19 = vector.extract_strided_slice %3 {offsets = [0, 2], sizes = [8, 1], strides = [1, 1]} : vector<8x4xf32> to vector<8x1xf32>
    %20 = vector.extract_strided_slice %1 {offsets = [2, 0], sizes = [1, 256], strides = [1, 1]} : vector<4x256xf32> to vector<1x256xf32>
    %21 = vector.broadcast %19 : vector<8x1xf32> to vector<8x256xf32>
    %22 = vector.broadcast %20 : vector<1x256xf32> to vector<8x256xf32>
    %23 = arith.mulf %21, %22 : vector<8x256xf32>
    %24 = arith.addf %18, %23 : vector<8x256xf32>
    %25 = vector.extract_strided_slice %3 {offsets = [0, 3], sizes = [8, 1], strides = [1, 1]} : vector<8x4xf32> to vector<8x1xf32>
    %26 = vector.extract_strided_slice %1 {offsets = [3, 0], sizes = [1, 256], strides = [1, 1]} : vector<4x256xf32> to vector<1x256xf32>
    %27 = vector.broadcast %25 : vector<8x1xf32> to vector<8x256xf32>
    %28 = vector.broadcast %26 : vector<1x256xf32> to vector<8x256xf32>
    %29 = arith.mulf %27, %28 : vector<8x256xf32>
    %30 = arith.addf %24, %29 : vector<8x256xf32>
    %31 = vector.broadcast %5 : vector<8x1xf32> to vector<8x256xf32>
    %32 = arith.addf %30, %31 : vector<8x256xf32>
    %cst = arith.constant dense<0xFF800000> : vector<256xf32>
    %33 = vector.multi_reduction <maximumf>, %32, %cst [0] : vector<8x256xf32> to vector<256xf32>
    %34 = vector.shape_cast %33 : vector<256xf32> to vector<1x256xf32>
    %35 = vector.broadcast %34 : vector<1x256xf32> to vector<8x256xf32>
    %36 = arith.subf %32, %35 : vector<8x256xf32>
    %37 = math.exp %36 : vector<8x256xf32>
    %cst_11 = arith.constant dense<0.000000e+00> : vector<256xf32>
    %38 = vector.multi_reduction <add>, %37, %cst_11 [0] : vector<8x256xf32> to vector<256xf32>
    %39 = vector.shape_cast %38 : vector<256xf32> to vector<1x256xf32>
    %40 = vector.extract_strided_slice %7 {offsets = [0, 0], sizes = [4, 1], strides = [1, 1]} : vector<4x8xf32> to vector<4x1xf32>
    %41 = vector.extract_strided_slice %37 {offsets = [0, 0], sizes = [1, 256], strides = [1, 1]} : vector<8x256xf32> to vector<1x256xf32>
    %42 = vector.broadcast %40 : vector<4x1xf32> to vector<4x256xf32>
    %43 = vector.broadcast %41 : vector<1x256xf32> to vector<4x256xf32>
    %44 = arith.mulf %42, %43 : vector<4x256xf32>
    %45 = vector.extract_strided_slice %7 {offsets = [0, 1], sizes = [4, 1], strides = [1, 1]} : vector<4x8xf32> to vector<4x1xf32>
    %46 = vector.extract_strided_slice %37 {offsets = [1, 0], sizes = [1, 256], strides = [1, 1]} : vector<8x256xf32> to vector<1x256xf32>
    %47 = vector.broadcast %45 : vector<4x1xf32> to vector<4x256xf32>
    %48 = vector.broadcast %46 : vector<1x256xf32> to vector<4x256xf32>
    %49 = arith.mulf %47, %48 : vector<4x256xf32>
    %50 = arith.addf %44, %49 : vector<4x256xf32>
    %51 = vector.extract_strided_slice %7 {offsets = [0, 2], sizes = [4, 1], strides = [1, 1]} : vector<4x8xf32> to vector<4x1xf32>
    %52 = vector.extract_strided_slice %37 {offsets = [2, 0], sizes = [1, 256], strides = [1, 1]} : vector<8x256xf32> to vector<1x256xf32>
    %53 = vector.broadcast %51 : vector<4x1xf32> to vector<4x256xf32>
    %54 = vector.broadcast %52 : vector<1x256xf32> to vector<4x256xf32>
    %55 = arith.mulf %53, %54 : vector<4x256xf32>
    %56 = arith.addf %50, %55 : vector<4x256xf32>
    %57 = vector.extract_strided_slice %7 {offsets = [0, 3], sizes = [4, 1], strides = [1, 1]} : vector<4x8xf32> to vector<4x1xf32>
    %58 = vector.extract_strided_slice %37 {offsets = [3, 0], sizes = [1, 256], strides = [1, 1]} : vector<8x256xf32> to vector<1x256xf32>
    %59 = vector.broadcast %57 : vector<4x1xf32> to vector<4x256xf32>
    %60 = vector.broadcast %58 : vector<1x256xf32> to vector<4x256xf32>
    %61 = arith.mulf %59, %60 : vector<4x256xf32>
    %62 = arith.addf %56, %61 : vector<4x256xf32>
    %63 = vector.extract_strided_slice %7 {offsets = [0, 4], sizes = [4, 1], strides = [1, 1]} : vector<4x8xf32> to vector<4x1xf32>
    %64 = vector.extract_strided_slice %37 {offsets = [4, 0], sizes = [1, 256], strides = [1, 1]} : vector<8x256xf32> to vector<1x256xf32>
    %65 = vector.broadcast %63 : vector<4x1xf32> to vector<4x256xf32>
    %66 = vector.broadcast %64 : vector<1x256xf32> to vector<4x256xf32>
    %67 = arith.mulf %65, %66 : vector<4x256xf32>
    %68 = arith.addf %62, %67 : vector<4x256xf32>
    %69 = vector.extract_strided_slice %7 {offsets = [0, 5], sizes = [4, 1], strides = [1, 1]} : vector<4x8xf32> to vector<4x1xf32>
    %70 = vector.extract_strided_slice %37 {offsets = [5, 0], sizes = [1, 256], strides = [1, 1]} : vector<8x256xf32> to vector<1x256xf32>
    %71 = vector.broadcast %69 : vector<4x1xf32> to vector<4x256xf32>
    %72 = vector.broadcast %70 : vector<1x256xf32> to vector<4x256xf32>
    %73 = arith.mulf %71, %72 : vector<4x256xf32>
    %74 = arith.addf %68, %73 : vector<4x256xf32>
    %75 = vector.extract_strided_slice %7 {offsets = [0, 6], sizes = [4, 1], strides = [1, 1]} : vector<4x8xf32> to vector<4x1xf32>
    %76 = vector.extract_strided_slice %37 {offsets = [6, 0], sizes = [1, 256], strides = [1, 1]} : vector<8x256xf32> to vector<1x256xf32>
    %77 = vector.broadcast %75 : vector<4x1xf32> to vector<4x256xf32>
    %78 = vector.broadcast %76 : vector<1x256xf32> to vector<4x256xf32>
    %79 = arith.mulf %77, %78 : vector<4x256xf32>
    %80 = arith.addf %74, %79 : vector<4x256xf32>
    %81 = vector.extract_strided_slice %7 {offsets = [0, 7], sizes = [4, 1], strides = [1, 1]} : vector<4x8xf32> to vector<4x1xf32>
    %82 = vector.extract_strided_slice %37 {offsets = [7, 0], sizes = [1, 256], strides = [1, 1]} : vector<8x256xf32> to vector<1x256xf32>
    %83 = vector.broadcast %81 : vector<4x1xf32> to vector<4x256xf32>
    %84 = vector.broadcast %82 : vector<1x256xf32> to vector<4x256xf32>
    %85 = arith.mulf %83, %84 : vector<4x256xf32>
    %86 = arith.addf %80, %85 : vector<4x256xf32>
    %87 = tpu.reciprocal %39 {approx = true} : vector<1x256xf32> -> vector<1x256xf32>
    %88 = vector.broadcast %87 : vector<1x256xf32> to vector<4x256xf32>
    %89 = arith.mulf %86, %88 : vector<4x256xf32>
    %c0_12 = arith.constant 0 : index
    %c0_13 = arith.constant 0 : index
    %90 = vector.load %arg6[%c0_12, %c0_13] : memref<4x1xf32, #tpu.memory_space<vmem>>, vector<4x1xf32>
    %91 = vector.broadcast %90 : vector<4x1xf32> to vector<4x256xf32>
    %92 = arith.addf %89, %91 : vector<4x256xf32>
    %93 = arith.addf %92, %1 : vector<4x256xf32>
    %c0_14 = arith.constant 0 : index
    %c0_15 = arith.constant 0 : index
    %c0_16 = arith.constant 0 : index
    %94 = vector.load %arg7[%c0_14, %c0_15, %c0_16] : memref<1x4x256xf32, #tpu.memory_space<vmem>>, vector<1x4x256xf32>
    %95 = vector.shape_cast %94 : vector<1x4x256xf32> to vector<4x256xf32>
    %96 = vector.shape_cast %93 : vector<4x256xf32> to vector<1x4x256xf32>
    tpu.vector_store %arg7[%c0_14, %c0_15, %c0_16], %96 {strides = array<i32>} : memref<1x4x256xf32, #tpu.memory_space<vmem>>, vector<1x4x256xf32>,
    return
  }
  func.func @transform_0(%arg0: i32, %arg1: i32) -> (i32, i32, i32) {
    %c0_i32 = arith.constant 0 : i32
    %c0_i32_0 = arith.constant 0 : i32
    return %arg0, %c0_i32, %arg1 : i32, i32, i32
  }
  func.func @transform_1(%arg0: i32, %arg1: i32) -> (i32, i32, i32) {
    %c0_i32 = arith.constant 0 : i32
    %c0_i32_0 = arith.constant 0 : i32
    %c0_i32_1 = arith.constant 0 : i32
    return %arg0, %c0_i32, %c0_i32_0 : i32, i32, i32
  }
  func.func @transform_2(%arg0: i32, %arg1: i32) -> (i32, i32, i32) {
    %c0_i32 = arith.constant 0 : i32
    %c0_i32_0 = arith.constant 0 : i32
    %c0_i32_1 = arith.constant 0 : i32
    return %arg0, %c0_i32, %c0_i32_0 : i32, i32, i32
  }
  func.func @transform_3(%arg0: i32, %arg1: i32) -> (i32, i32, i32) {
    %c0_i32 = arith.constant 0 : i32
    %c0_i32_0 = arith.constant 0 : i32
    %c0_i32_1 = arith.constant 0 : i32
    return %arg0, %c0_i32, %c0_i32_0 : i32, i32, i32
  }
  func.func @transform_4(%arg0: i32, %arg1: i32) -> (i32, i32) {
    %c0_i32 = arith.constant 0 : i32
    %c0_i32_0 = arith.constant 0 : i32
    %c0_i32_1 = arith.constant 0 : i32
    return %c0_i32, %c0_i32_0 : i32, i32
  }
  func.func @transform_5(%arg0: i32, %arg1: i32) -> (i32, i32, i32) {
    %c0_i32 = arith.constant 0 : i32
    %c0_i32_0 = arith.constant 0 : i32
    return %arg0, %c0_i32, %arg1 : i32, i32, i32
  }
}

</mosaic_0001>

<llo_original>
// kernel: tpu_custom_call.1
$region0: #{tpu_custom_call.1}
  #allocation0 [shape = 'u32[]', space=smem, size = 0x4, offset = 0x4, fixed_abs, tag = 'smem constant byte address 0x4 - core index']
  #allocation1 [shape = 'u32[144,128]{1,0:T(1,128)}', space=vmem, size = 0x12000, scoped, tag = 'internal scratch']
  %s0 = inlined_call_operand.vmem [shape: f32[2,4,256], index: 0, kind: input, shape index: {}]
  %s1 = inlined_call_operand.vmem [shape: f32[2,8,4], index: 1, kind: input, shape index: {}]
  %s2 = inlined_call_operand.vmem [shape: f32[2,8,1], index: 2, kind: input, shape index: {}]
  %s3 = inlined_call_operand.vmem [shape: f32[2,4,8], index: 3, kind: input, shape index: {}]
  %s4 = inlined_call_operand.vmem [shape: f32[4,1], index: 4, kind: input, shape index: {}]
  %s5 = inlined_call_operand.hbm [shape: f32[2,4,256], index: 5, kind: output, shape index: {}]
  %s6 = sld [smem:[#allocation0]]
  $region53: #{tpu_custom_call.1} parent=0
    _
  %s8 = ssub.s32 1, %s6
  %s9 = scalar_select 0, %s8, %s6
  $region1: #{tpu_custom_call.1} parent=0
    #allocation2 [shape = 'u8[8192]{0}', space=vmem, size = 0x2000, scoped, tag = 'output window, operand 0']
    #allocation3 [shape = 's32[2]{0}', space=sflag, size = 0x8, scoped, tag = 'scoped memory for tpu_custom_call.1']
    %10 = vsyncpa [#allocation3], 0
    %s11 = scalar_lea.sflag [#allocation3], 1
    %12 = vsyncpa %s11, 0
    loop: start=0, step=1, limit=4
    $region2: #{tpu_custom_call.1} parent=1 // loop_pre_header
      _
    $region3: #{tpu_custom_call.1} parent=1 // loop_header
      %s14 = sphi 0, %s18
      %p15 = scmp.ge.s32.totalorder %s14, 4
      %s21 = sphi 0, %s33
      %s22 = sphi 0, %s29
      %s23 = sphi 0, %s21
      %s24 = sphi 0, %s22
      %s25 = sphi 0, %s23
      %s26 = sphi 0, %s24
      %s38 = sphi 0, %s40
      %s41 = sphi 0, %s38
      %s42 = sphi 0, %s41
      %s58 = sphi 0, %s42
      %s64 = sphi 0, %s66
      %s67 = sphi 0, %s64
      %s68 = sphi 0, %s67
      %s84 = sphi 0, %s68
      %s90 = sphi 0, %s92
      %s93 = sphi 0, %s90
      %s94 = sphi 0, %s93
      %s110 = sphi 0, %s94
      %s116 = sphi 0, %s118
      %s119 = sphi 0, %s116
      %s120 = sphi 0, %s119
      %s136 = sphi 0, %s120
      %s140 = sphi 0, %s140
      %s142 = sphi 0, %s140
      %s143 = sphi 0, %s142
      %s157 = sphi 0, %s143
      %s165 = sphi 0, %s167
      %s168 = sphi 0, %s165
      %s169 = sphi 0, %s168
      %s185 = sphi 0, %s169
    $region4: #{tpu_custom_call.1} parent=1 // loop_header_branch
      %17 = sbr.rel (%p15) target = $region8
    $region5: #{tpu_custom_call.1} parent=1 // loop_body
      %s19 = ssub.s32 %s14, 1
      %s20 = ssub.s32 %s14, 2
      %s27 = sadd.s32 1, %s22
      %p28 = scmp.ge.s32.totalorder %s27, 1
      %s29 = scalar_select %p28, 0, %s27
      %s30 = sadd.s32 1, %s21
      %s31 = scalar_select %p28, %s30, %s21
      %p32 = scmp.ge.s32.totalorder %s31, 2
      %s33 = scalar_select %p32, 0, %s31
      %s34 = ssub.s32 %s21, %s33
      %s35 = ssub.s32 %s22, %s29
      %s36 = sor.u32 %s34, %s35
      %p37 = scmp.eq.s32.totalorder %s36, 0
      %s39 = sadd.s32 %s38, 1
      %s40 = scalar_select %p37, %s38, %s39
      %p43 = pneg %p37
      %p44 = scmp.eq.s32.totalorder %s14, 1
      %p45 = por %p43, %p44
      %p46 = scmp.ne.s32.totalorder %s38, %s41
      %p47 = scmp.eq.s32.totalorder %s14, 0
      %p48 = por %p46, %p47
      %p49 = scmp.ne.s32.totalorder %s38, %s41
      %p50 = scmp.eq.s32.totalorder %s19, 1
      %p51 = por %p49, %p50
      %p52 = scmp.ne.s32.totalorder %s41, %s42
      %p53 = scmp.eq.s32.totalorder %s19, 0
      %p54 = por %p52, %p53
      %p55 = scmp.ne.s32.totalorder %s41, %s42
      %p56 = scmp.eq.s32.totalorder %s20, 1
      %p57 = por %p55, %p56
      %p59 = scmp.ne.s32.totalorder %s42, %s58
      %p60 = scmp.eq.s32.totalorder %s20, 0
      %p61 = por %p59, %p60
      %s62 = ssub.s32 %s21, %s33
      %p63 = scmp.eq.s32.totalorder %s62, 0
      %s65 = sadd.s32 %s64, 1
      %s66 = scalar_select %p63, %s64, %s65
      %p69 = pneg %p63
      %p70 = scmp.eq.s32.totalorder %s14, 1
      %p71 = por %p69, %p70
      %p72 = scmp.ne.s32.totalorder %s64, %s67
      %p73 = scmp.eq.s32.totalorder %s14, 0
      %p74 = por %p72, %p73
      %p75 = scmp.ne.s32.totalorder %s64, %s67
      %p76 = scmp.eq.s32.totalorder %s19, 1
      %p77 = por %p75, %p76
      %p78 = scmp.ne.s32.totalorder %s67, %s68
      %p79 = scmp.eq.s32.totalorder %s19, 0
      %p80 = por %p78, %p79
      %p81 = scmp.ne.s32.totalorder %s67, %s68
      %p82 = scmp.eq.s32.totalorder %s20, 1
      %p83 = por %p81, %p82
      %p85 = scmp.ne.s32.totalorder %s68, %s84
      %p86 = scmp.eq.s32.totalorder %s20, 0
      %p87 = por %p85, %p86
      %s88 = ssub.s32 %s21, %s33
      %p89 = scmp.eq.s32.totalorder %s88, 0
      %s91 = sadd.s32 %s90, 1
      %s92 = scalar_select %p89, %s90, %s91
      %p95 = pneg %p89
      %p96 = scmp.eq.s32.totalorder %s14, 1
      %p97 = por %p95, %p96
      %p98 = scmp.ne.s32.totalorder %s90, %s93
      %p99 = scmp.eq.s32.totalorder %s14, 0
      %p100 = por %p98, %p99
      %p101 = scmp.ne.s32.totalorder %s90, %s93
      %p102 = scmp.eq.s32.totalorder %s19, 1
      %p103 = por %p101, %p102
      %p104 = scmp.ne.s32.totalorder %s93, %s94
      %p105 = scmp.eq.s32.totalorder %s19, 0
      %p106 = por %p104, %p105
      %p107 = scmp.ne.s32.totalorder %s93, %s94
      %p108 = scmp.eq.s32.totalorder %s20, 1
      %p109 = por %p107, %p108
      %p111 = scmp.ne.s32.totalorder %s94, %s110
      %p112 = scmp.eq.s32.totalorder %s20, 0
      %p113 = por %p111, %p112
      %s114 = ssub.s32 %s21, %s33
      %p115 = scmp.eq.s32.totalorder %s114, 0
      %s117 = sadd.s32 %s116, 1
      %s118 = scalar_select %p115, %s116, %s117
      %p121 = pneg %p115
      %p122 = scmp.eq.s32.totalorder %s14, 1
      %p123 = por %p121, %p122
      %p124 = scmp.ne.s32.totalorder %s116, %s119
      %p125 = scmp.eq.s32.totalorder %s14, 0
      %p126 = por %p124, %p125
      %p127 = scmp.ne.s32.totalorder %s116, %s119
      %p128 = scmp.eq.s32.totalorder %s19, 1
      %p129 = por %p127, %p128
      %p130 = scmp.ne.s32.totalorder %s119, %s120
      %p131 = scmp.eq.s32.totalorder %s19, 0
      %p132 = por %p130, %p131
      %p133 = scmp.ne.s32.totalorder %s119, %s120
      %p134 = scmp.eq.s32.totalorder %s20, 1
      %p135 = por %p133, %p134
      %p137 = scmp.ne.s32.totalorder %s120, %s136
      %p138 = scmp.eq.s32.totalorder %s20, 0
      %p139 = por %p137, %p138
      %s141 = sadd.s32 %s140, 1
      %p144 = scmp.eq.s32.totalorder %s14, 1
      %p145 = scmp.ne.s32.totalorder %s140, %s142
      %p146 = scmp.eq.s32.totalorder %s14, 0
      %p147 = por %p145, %p146
      %p148 = scmp.ne.s32.totalorder %s140, %s142
      %p149 = scmp.eq.s32.totalorder %s19, 1
      %p150 = por %p148, %p149
      %p151 = scmp.ne.s32.totalorder %s142, %s143
      %p152 = scmp.eq.s32.totalorder %s19, 0
      %p153 = por %p151, %p152
      %p154 = scmp.ne.s32.totalorder %s142, %s143
      %p155 = scmp.eq.s32.totalorder %s20, 1
      %p156 = por %p154, %p155
      %p158 = scmp.ne.s32.totalorder %s143, %s157
      %p159 = scmp.eq.s32.totalorder %s20, 0
      %p160 = por %p158, %p159
      %s161 = ssub.s32 %s21, %s33
      %s162 = ssub.s32 %s22, %s29
      %s163 = sor.u32 %s161, %s162
      %p164 = scmp.eq.s32.totalorder %s163, 0
      %s166 = sadd.s32 %s165, 1
      %s167 = scalar_select %p164, %s165, %s166
      %p170 = pneg %p164
      %p171 = scmp.eq.s32.totalorder %s14, 1
      %p172 = por %p170, %p171
      %p173 = scmp.ne.s32.totalorder %s165, %s168
      %p174 = scmp.eq.s32.totalorder %s14, 0
      %p175 = por %p173, %p174
      %p176 = scmp.ne.s32.totalorder %s165, %s168
      %p177 = scmp.eq.s32.totalorder %s19, 1
      %p178 = por %p176, %p177
      %p179 = scmp.ne.s32.totalorder %s168, %s169
      %p180 = scmp.eq.s32.totalorder %s19, 0
      %p181 = por %p179, %p180
      %p182 = scmp.ne.s32.totalorder %s168, %s169
      %p183 = scmp.eq.s32.totalorder %s20, 1
      %p184 = por %p182, %p183
      %p186 = scmp.ne.s32.totalorder %s169, %s185
      %p187 = scmp.eq.s32.totalorder %s20, 0
      %p188 = por %p186, %p187
      %p189 = scmp.le.s32.totalorder 1, %s14
      %p190 = scmp.lt.s32.totalorder %s14, 3
      %p191 = pnand %p189, %p190
      %p192 = pneg %p191
      // Predicated region
      $region9: #{tpu_custom_call.1} parent=5 // pred_check
        _
      $region10: #{tpu_custom_call.1} parent=5 // pred_check_branch
        %194 = sbr.rel (%p191) target = $region12
      $region11: #{tpu_custom_call.1} parent=5 // pred_region
        %s195 = ssub.s32 %s14, 1
        // Predicated region
        $region13: #{tpu_custom_call.1} parent=11 // pred_check
          %p196 = pneg %p153
        $region14: #{tpu_custom_call.1} parent=11 // pred_check_branch
          %198 = sbr.rel (%p196) target = $region16
        $region15: #{tpu_custom_call.1} parent=11 // pred_region
          _
        $region16: #{tpu_custom_call.1} parent=11 // pred_fallthru
          _
      $region12: #{tpu_custom_call.1} parent=5 // pred_fallthru
        _
      %p199 = scmp.lt.s32.totalorder %s14, 2
      // Predicated region
      $region17: #{tpu_custom_call.1} parent=5 // pred_check
        %p200 = pneg %p199
      $region18: #{tpu_custom_call.1} parent=5 // pred_check_branch
        %202 = sbr.rel (%p200) target = $region20
      $region19: #{tpu_custom_call.1} parent=5 // pred_region
        // Predicated region
        $region21: #{tpu_custom_call.1} parent=19 // pred_check
          %p203 = pneg %p48
        $region22: #{tpu_custom_call.1} parent=19 // pred_check_branch
          %205 = sbr.rel (%p203) target = $region24
        $region23: #{tpu_custom_call.1} parent=19 // pred_region
          %s206 = smul.u32 2, %s22
          %p207 = scmp.lt.s32.totalorder %s21, 1
          %s208 = scalar_select %p207, %s21, 1
          %p209 = scmp.lt.s32.totalorder %s206, 1
          %s210 = scalar_select %p209, %s206, 1
          %s211 = smul.addr %s208, 2
          %s212 = sadd.s32 %s210, %s211
          %s213 = smul.addr %s212, 4
          %s214 = scalar_lea.vmem %s0, %s213
          %s215 = smul.u32 2, %s22
        $region24: #{tpu_custom_call.1} parent=19 // pred_fallthru
          _
        // Predicated region
        $region25: #{tpu_custom_call.1} parent=19 // pred_check
          %p216 = pneg %p74
        $region26: #{tpu_custom_call.1} parent=19 // pred_check_branch
          %218 = sbr.rel (%p216) target = $region28
        $region27: #{tpu_custom_call.1} parent=19 // pred_region
          %p219 = scmp.lt.s32.totalorder %s21, 1
          %s220 = scalar_select %p219, %s21, 1
          %s221 = smul.addr %s220, 8
          %s222 = scalar_lea.vmem %s1, %s221
        $region28: #{tpu_custom_call.1} parent=19 // pred_fallthru
          _
        // Predicated region
        $region29: #{tpu_custom_call.1} parent=19 // pred_check
          %p223 = pneg %p100
        $region30: #{tpu_custom_call.1} parent=19 // pred_check_branch
          %225 = sbr.rel (%p223) target = $region32
        $region31: #{tpu_custom_call.1} parent=19 // pred_region
          %p226 = scmp.lt.s32.totalorder %s21, 1
          %s227 = scalar_select %p226, %s21, 1
          %s228 = smul.addr %s227, 8
          %s229 = scalar_lea.vmem %s2, %s228
        $region32: #{tpu_custom_call.1} parent=19 // pred_fallthru
          _
        // Predicated region
        $region33: #{tpu_custom_call.1} parent=19 // pred_check
          %p230 = pneg %p126
        $region34: #{tpu_custom_call.1} parent=19 // pred_check_branch
          %232 = sbr.rel (%p230) target = $region36
        $region35: #{tpu_custom_call.1} parent=19 // pred_region
          %p233 = scmp.lt.s32.totalorder %s21, 1
          %s234 = scalar_select %p233, %s21, 1
          %s235 = smul.addr %s234, 4
          %s236 = scalar_lea.vmem %s3, %s235
        $region36: #{tpu_custom_call.1} parent=19 // pred_fallthru
          _
      $region20: #{tpu_custom_call.1} parent=5 // pred_fallthru
        _
      %p237 = scmp.le.s32.totalorder 1, %s14
      %p238 = scmp.lt.s32.totalorder %s14, 3
      %p239 = pnand %p237, %p238
      %p240 = pneg %p239
      // Predicated region
      $region37: #{tpu_custom_call.1} parent=5 // pred_check
        _
      $region38: #{tpu_custom_call.1} parent=5 // pred_check_branch
        %242 = sbr.rel (%p239) target = $region40
      $region39: #{tpu_custom_call.1} parent=5 // pred_region
        %s243 = ssub.s32 %s14, 1
        %s244 = smul.u32 2, %s24
        %p245 = scmp.lt.s32.totalorder %s23, 1
        %s246 = scalar_select %p245, %s23, 1
        %p247 = scmp.lt.s32.totalorder %s244, 1
        %s248 = scalar_select %p247, %s244, 1
        %s249 = smul.addr %s246, 2
        %s250 = sadd.s32 %s248, %s249
        %s251 = smul.addr %s250, 4
        %s252 = scalar_lea.vmem %s0, %s251
        %p253 = pneg %p54
        %p254 = pneg %p51
        %p255 = scmp.lt.s32.totalorder %s23, 1
        %s256 = scalar_select %p255, %s23, 1
        %s257 = smul.addr %s256, 8
        %s258 = scalar_lea.vmem %s1, %s257
        %p259 = pneg %p80
        %p260 = pneg %p77
        %p261 = scmp.lt.s32.totalorder %s23, 1
        %s262 = scalar_select %p261, %s23, 1
        %s263 = smul.addr %s262, 8
        %s264 = scalar_lea.vmem %s2, %s263
        %p265 = pneg %p106
        %p266 = pneg %p103
        %p267 = scmp.lt.s32.totalorder %s23, 1
        %s268 = scalar_select %p267, %s23, 1
        %s269 = smul.addr %s268, 4
        %s270 = scalar_lea.vmem %s3, %s269
        %p271 = pneg %p132
        %p272 = pneg %p129
        %p273 = pneg %p153
        %p274 = pneg %p150
        %p275 = pneg %p181
        %p276 = pneg %p178
        %s277 = sand.u32 %s168, 1
        %s278 = scalar_lea.sflag [#allocation3], %s277
        %s279 = sand.u32 %s168, 1
        %s280 = smul.addr %s279, 8
        %s281 = scalar_lea.vmem [#allocation2], %s280
        %s282 = smul.u32 2, %s24
        %p283 = scmp.lt.s32.totalorder %s23, 1
        %s284 = scalar_select %p283, %s23, 1
        %p285 = scmp.lt.s32.totalorder %s282, 1
        %s286 = scalar_select %p285, %s282, 1
        %s287 = smul.addr %s284, 2
        %s288 = sadd.s32 %s286, %s287
        %s289 = smul.addr %s288, 4
        %s290 = scalar_lea.vmem %s0, %s289
        %s291 = smul.u32 2, %s24
        %p292 = scmp.lt.s32.totalorder %s23, 1
        %s293 = scalar_select %p292, %s23, 1
        %s294 = smul.addr %s293, 8
        %s295 = scalar_lea.vmem %s1, %s294
        %p296 = scmp.lt.s32.totalorder %s23, 1
        %s297 = scalar_select %p296, %s23, 1
        %s298 = smul.addr %s297, 8
        %s299 = scalar_lea.vmem %s2, %s298
        %p300 = scmp.lt.s32.totalorder %s23, 1
        %s301 = scalar_select %p300, %s23, 1
        %s302 = smul.addr %s301, 4
        %s303 = scalar_lea.vmem %s3, %s302
        %s304 = smul.u32 2, %s24
        %v305 = vld [vmem:[%s290] sm:$0xff]
        %v306 = vld [vmem:[%s295] sm:$0xff]
        %v307 = vld [vmem:[%s299] sm:$0xff]
        %v308 = vld [vmem:[%s303] sm:$0xf]
        %310 = vset.pattern.permute.xlu0 0
        %311 = vperm.xlu0 %310, %v306
        %v312 = vpop.permute.xlu0 %311
        %v315 = vlaneseq
        %v316 = vshrl.u32 %v315, 7
        %v317 = vsub.s32 0, %v316
        %v318 = vrot.slane %v305, %v317
        %v319 = vlaneseq
        %v320 = vshrl.u32 %v319, 7
        %v321 = vsub.s32 4, %v320
        %v322 = vrot.slane %v305, %v321
        %v325 = vlaneseq
        %v326 = vshrl.u32 %v325, 7
        %v327 = vsub.s32 0, %v326
        %v328 = vrot.slane %v318, %v327
        %v329 = vlaneseq
        %v330 = vshrl.u32 %v329, 7
        %v331 = vsub.s32 0, %v330
        %v332 = vrot.slane %v322, %v331
        %v333 = vmul.f32 %v312, %v328
        %v334 = vmul.f32 %v312, %v332
        %335 = vset.pattern.permute.xlu0 1
        %336 = vperm.xlu0 %335, %v306
        %v337 = vpop.permute.xlu0 %336
        %v339 = vlaneseq
        %v340 = vshrl.u32 %v339, 7
        %v341 = vsub.s32 1, %v340
        %v342 = vrot.slane %v305, %v341
        %v343 = vlaneseq
        %v344 = vshrl.u32 %v343, 7
        %v345 = vsub.s32 5, %v344
        %v346 = vrot.slane %v305, %v345
        %v349 = vlaneseq
        %v350 = vshrl.u32 %v349, 7
        %v351 = vsub.s32 1, %v350
        %v352 = vrot.slane %v342, %v351
        %v353 = vlaneseq
        %v354 = vshrl.u32 %v353, 7
        %v355 = vsub.s32 1, %v354
        %v356 = vrot.slane %v346, %v355
        %v357 = vmul.f32 %v337, %v352
        %v358 = vmul.f32 %v337, %v356
        %v359 = vadd.f32 %v333, %v357
        %v360 = vadd.f32 %v334, %v358
        %361 = vset.pattern.permute.xlu0 2
        %362 = vperm.xlu0 %361, %v306
        %v363 = vpop.permute.xlu0 %362
        %v365 = vlaneseq
        %v366 = vshrl.u32 %v365, 7
        %v367 = vsub.s32 2, %v366
        %v368 = vrot.slane %v305, %v367
        %v369 = vlaneseq
        %v370 = vshrl.u32 %v369, 7
        %v371 = vsub.s32 6, %v370
        %v372 = vrot.slane %v305, %v371
        %v375 = vlaneseq
        %v376 = vshrl.u32 %v375, 7
        %v377 = vsub.s32 2, %v376
        %v378 = vrot.slane %v368, %v377
        %v379 = vlaneseq
        %v380 = vshrl.u32 %v379, 7
        %v381 = vsub.s32 2, %v380
        %v382 = vrot.slane %v372, %v381
        %v383 = vmul.f32 %v363, %v378
        %v384 = vmul.f32 %v363, %v382
        %v385 = vadd.f32 %v359, %v383
        %v386 = vadd.f32 %v360, %v384
        %387 = vset.pattern.permute.xlu0 3
        %388 = vperm.xlu0 %387, %v306
        %v389 = vpop.permute.xlu0 %388
        %v391 = vlaneseq
        %v392 = vshrl.u32 %v391, 7
        %v393 = vsub.s32 3, %v392
        %v394 = vrot.slane %v305, %v393
        %v395 = vlaneseq
        %v396 = vshrl.u32 %v395, 7
        %v397 = vsub.s32 7, %v396
        %v398 = vrot.slane %v305, %v397
        %v401 = vlaneseq
        %v402 = vshrl.u32 %v401, 7
        %v403 = vsub.s32 3, %v402
        %v404 = vrot.slane %v394, %v403
        %v405 = vlaneseq
        %v406 = vshrl.u32 %v405, 7
        %v407 = vsub.s32 3, %v406
        %v408 = vrot.slane %v398, %v407
        %v409 = vmul.f32 %v389, %v404
        %v410 = vmul.f32 %v389, %v408
        %v411 = vadd.f32 %v385, %v409
        %v412 = vadd.f32 %v386, %v410
        %414 = vset.pattern.permute.xlu0 0
        %415 = vperm.xlu0 %414, %v307
        %v416 = vpop.permute.xlu0 %415
        %v418 = vadd.f32 %v411, %v416
        %v419 = vadd.f32 %v412, %v416
        %v420 = vrot.slane %v418, 4
        %v421 = vmax.f32 %v418, %v420
        %v422 = vrot.slane %v421, 2
        %v423 = vmax.f32 %v421, %v422
        %v424 = vrot.slane %v423, 1
        %v425 = vmax.f32 %v423, %v424
        %v426 = vrot.slane %v419, 4
        %v427 = vmax.f32 %v419, %v426
        %v428 = vrot.slane %v427, 2
        %v429 = vmax.f32 %v427, %v428
        %v430 = vrot.slane %v429, 1
        %v431 = vmax.f32 %v429, %v430
        %v432 = vsub.f32 %v418, %v425
        %v433 = vsub.f32 %v419, %v431
        %v434 = vmul.f32 %v432, 1.442695
        %v435 = vpow.pop %v434
        %v436 = vmul.f32 %v433, 1.442695
        %v437 = vpow.pop %v436
        %v438 = vrot.slane %v435, 4
        %v439 = vadd.f32 %v435, %v438
        %v440 = vrot.slane %v439, 2
        %v441 = vadd.f32 %v439, %v440
        %v442 = vrot.slane %v441, 1
        %v443 = vadd.f32 %v441, %v442
        %v444 = vrot.slane %v437, 4
        %v445 = vadd.f32 %v437, %v444
        %v446 = vrot.slane %v445, 2
        %v447 = vadd.f32 %v445, %v446
        %v448 = vrot.slane %v447, 1
        %v449 = vadd.f32 %v447, %v448
        %451 = vset.pattern.permute.xlu0 0
        %452 = vperm.xlu0 %451, %v308
        %v453 = vpop.permute.xlu0 %452
        %v455 = vlaneseq
        %v456 = vshrl.u32 %v455, 7
        %v457 = vsub.s32 0, %v456
        %v458 = vrot.slane %v435, %v457
        %v459 = vlaneseq
        %v460 = vshrl.u32 %v459, 7
        %v461 = vsub.s32 0, %v460
        %v462 = vrot.slane %v437, %v461
        %v463 = vmul.f32 %v453, %v458
        %v464 = vmul.f32 %v453, %v462
        %465 = vset.pattern.permute.xlu0 1
        %466 = vperm.xlu0 %465, %v308
        %v467 = vpop.permute.xlu0 %466
        %v469 = vlaneseq
        %v470 = vshrl.u32 %v469, 7
        %v471 = vsub.s32 1, %v470
        %v472 = vrot.slane %v435, %v471
        %v473 = vlaneseq
        %v474 = vshrl.u32 %v473, 7
        %v475 = vsub.s32 1, %v474
        %v476 = vrot.slane %v437, %v475
        %v477 = vmul.f32 %v467, %v472
        %v478 = vmul.f32 %v467, %v476
        %v479 = vadd.f32 %v463, %v477
        %v480 = vadd.f32 %v464, %v478
        %481 = vset.pattern.permute.xlu0 2
        %482 = vperm.xlu0 %481, %v308
        %v483 = vpop.permute.xlu0 %482
        %v485 = vlaneseq
        %v486 = vshrl.u32 %v485, 7
        %v487 = vsub.s32 2, %v486
        %v488 = vrot.slane %v435, %v487
        %v489 = vlaneseq
        %v490 = vshrl.u32 %v489, 7
        %v491 = vsub.s32 2, %v490
        %v492 = vrot.slane %v437, %v491
        %v493 = vmul.f32 %v483, %v488
        %v494 = vmul.f32 %v483, %v492
        %v495 = vadd.f32 %v479, %v493
        %v496 = vadd.f32 %v480, %v494
        %497 = vset.pattern.permute.xlu0 3
        %498 = vperm.xlu0 %497, %v308
        %v499 = vpop.permute.xlu0 %498
        %v501 = vlaneseq
        %v502 = vshrl.u32 %v501, 7
        %v503 = vsub.s32 3, %v502
        %v504 = vrot.slane %v435, %v503
        %v505 = vlaneseq
        %v506 = vshrl.u32 %v505, 7
        %v507 = vsub.s32 3, %v506
        %v508 = vrot.slane %v437, %v507
        %v509 = vmul.f32 %v499, %v504
        %v510 = vmul.f32 %v499, %v508
        %v511 = vadd.f32 %v495, %v509
        %v512 = vadd.f32 %v496, %v510
        %513 = vset.pattern.permute.xlu0 4
        %514 = vperm.xlu0 %513, %v308
        %v515 = vpop.permute.xlu0 %514
        %v517 = vlaneseq
        %v518 = vshrl.u32 %v517, 7
        %v519 = vsub.s32 4, %v518
        %v520 = vrot.slane %v435, %v519
        %v521 = vlaneseq
        %v522 = vshrl.u32 %v521, 7
        %v523 = vsub.s32 4, %v522
        %v524 = vrot.slane %v437, %v523
        %v525 = vmul.f32 %v515, %v520
        %v526 = vmul.f32 %v515, %v524
        %v527 = vadd.f32 %v511, %v525
        %v528 = vadd.f32 %v512, %v526
        %529 = vset.pattern.permute.xlu0 5
        %530 = vperm.xlu0 %529, %v308
        %v531 = vpop.permute.xlu0 %530
        %v533 = vlaneseq
        %v534 = vshrl.u32 %v533, 7
        %v535 = vsub.s32 5, %v534
        %v536 = vrot.slane %v435, %v535
        %v537 = vlaneseq
        %v538 = vshrl.u32 %v537, 7
        %v539 = vsub.s32 5, %v538
        %v540 = vrot.slane %v437, %v539
        %v541 = vmul.f32 %v531, %v536
        %v542 = vmul.f32 %v531, %v540
        %v543 = vadd.f32 %v527, %v541
        %v544 = vadd.f32 %v528, %v542
        %545 = vset.pattern.permute.xlu0 6
        %546 = vperm.xlu0 %545, %v308
        %v547 = vpop.permute.xlu0 %546
        %v549 = vlaneseq
        %v550 = vshrl.u32 %v549, 7
        %v551 = vsub.s32 6, %v550
        %v552 = vrot.slane %v435, %v551
        %v553 = vlaneseq
        %v554 = vshrl.u32 %v553, 7
        %v555 = vsub.s32 6, %v554
        %v556 = vrot.slane %v437, %v555
        %v557 = vmul.f32 %v547, %v552
        %v558 = vmul.f32 %v547, %v556
        %v559 = vadd.f32 %v543, %v557
        %v560 = vadd.f32 %v544, %v558
        %561 = vset.pattern.permute.xlu0 7
        %562 = vperm.xlu0 %561, %v308
        %v563 = vpop.permute.xlu0 %562
        %v565 = vlaneseq
        %v566 = vshrl.u32 %v565, 7
        %v567 = vsub.s32 7, %v566
        %v568 = vrot.slane %v435, %v567
        %v569 = vlaneseq
        %v570 = vshrl.u32 %v569, 7
        %v571 = vsub.s32 7, %v570
        %v572 = vrot.slane %v437, %v571
        %v573 = vmul.f32 %v563, %v568
        %v574 = vmul.f32 %v563, %v572
        %v575 = vadd.f32 %v559, %v573
        %v576 = vadd.f32 %v560, %v574
        %v577 = vrcp.pop %v443
        %v578 = vrcp.pop %v449
        %v579 = vmul.f32 %v575, %v577
        %v580 = vmul.f32 %v576, %v578
        %v581 = vld [vmem:[%s4] sm:$0xf]
        %583 = vset.pattern.permute.xlu0 0
        %584 = vperm.xlu0 %583, %v581
        %v585 = vpop.permute.xlu0 %584
        %v587 = vadd.f32 %v579, %v585
        %v588 = vadd.f32 %v580, %v585
        %v589 = vcombine.high %v305, %v305
        %v591 = vadd.f32 %v587, %v305
        %v592 = vadd.f32 %v588, %v589
        %v595 = vcombine.low %v591, %v592
        %597 = vst [vmem:[%s281] sm:$0xff] %v595
        %s598 = sand.u32 %s168, 1
        %s599 = scalar_lea.sflag [#allocation3], %s598
        %s600 = sand.u32 %s168, 1
        %s601 = smul.addr %s600, 8
        %s602 = scalar_lea.vmem [#allocation2], %s601
        // Predicated region
        $region41: #{tpu_custom_call.1} parent=39 // pred_check
          %p603 = pneg %p178
        $region42: #{tpu_custom_call.1} parent=39 // pred_check_branch
          %605 = sbr.rel (%p603) target = $region44
        $region43: #{tpu_custom_call.1} parent=39 // pred_region
          %s606 = smul.u32 2, %s24
          %s608 = ssub.s32 128, 128
          %609 = vsyncadd %s599, %s608
          %s610 = smul.addr %s23, 2
          %s611 = sadd.s32 %s606, %s610
          %s612 = smul.addr %s611, 64
          %s613 = scalar_lea.hbm %s5, %s612
          %s615 = sshll.u32 %s602, 4
          %s616 = int_to_ptr.vmem [resolvable:$true] %s615
          %618 = dma.vmem_to_hbm [thread:$0]  %s616, 128, %s613, %s599
        $region44: #{tpu_custom_call.1} parent=39 // pred_fallthru
          _
      $region40: #{tpu_custom_call.1} parent=5 // pred_fallthru
        _
      %p619 = scmp.le.s32.totalorder 2, %s14
      // Predicated region
      $region45: #{tpu_custom_call.1} parent=5 // pred_check
        %p620 = pneg %p619
      $region46: #{tpu_custom_call.1} parent=5 // pred_check_branch
        %622 = sbr.rel (%p620) target = $region48
      $region47: #{tpu_custom_call.1} parent=5 // pred_region
        %s623 = ssub.s32 %s14, 2
        // Predicated region
        $region49: #{tpu_custom_call.1} parent=47 // pred_check
          %p624 = pneg %p184
        $region50: #{tpu_custom_call.1} parent=47 // pred_check_branch
          %626 = sbr.rel (%p624) target = $region52
        $region51: #{tpu_custom_call.1} parent=47 // pred_region
          %s627 = sand.u32 %s169, 1
          %s628 = scalar_lea.sflag [#allocation3], %s627
          %s629 = sand.u32 %s169, 1
          %s630 = smul.addr %s629, 8
          %s631 = scalar_lea.vmem [#allocation2], %s630
          %632 = dma.done %s628, 128
        $region52: #{tpu_custom_call.1} parent=47 // pred_fallthru
          _
      $region48: #{tpu_custom_call.1} parent=5 // pred_fallthru
        _
    $region6: #{tpu_custom_call.1} parent=1 // loop_footer
      %s18 = sadd.s32 1, %s14
    $region7: #{tpu_custom_call.1} parent=1 // loop_footer_branch
      %13 = sbr.rel target = $region3
    $region8: #{tpu_custom_call.1} parent=1 // loop_exit
      _
    %633 = vsyncpa [#allocation3], 1
    %s634 = scalar_lea.sflag [#allocation3], 1
    %635 = vsyncpa %s634, 1

// kernel: tpu_custom_call.1
$region0: #{tpu_custom_call.1}
  #allocation0 [shape = 'u32[]', space=smem, size = 0x4, offset = 0x4, fixed_abs, tag = 'smem constant byte address 0x4 - core index']
  #allocation1 [shape = 'u32[144,128]{1,0:T(1,128)}', space=vmem, size = 0x12000, scoped, tag = 'internal scratch']
  %s0 = inlined_call_operand.vmem [shape: f32[2,4,256], index: 0, kind: input, shape index: {}]
  %s1 = inlined_call_operand.vmem [shape: f32[2,8,4], index: 1, kind: input, shape index: {}]
  %s2 = inlined_call_operand.vmem [shape: f32[2,8,1], index: 2, kind: input, shape index: {}]
  %s3 = inlined_call_operand.vmem [shape: f32[2,4,8], index: 3, kind: input, shape index: {}]
  %s4 = inlined_call_operand.vmem [shape: f32[4,1], index: 4, kind: input, shape index: {}]
  %s5 = inlined_call_operand.hbm [shape: f32[2,4,256], index: 5, kind: output, shape index: {}]
  %s6 = sld [smem:[#allocation0]]
  $region53: #{tpu_custom_call.1} parent=0
    _
  %s8 = ssub.s32 1, %s6
  %s9 = scalar_select 0, %s8, %s6
  $region1: #{tpu_custom_call.1} parent=0
    #allocation2 [shape = 'u8[8192]{0}', space=vmem, size = 0x2000, scoped, tag = 'output window, operand 0']
    #allocation3 [shape = 's32[2]{0}', space=sflag, size = 0x8, scoped, tag = 'scoped memory for tpu_custom_call.1']
    %10 = vsyncpa [#allocation3], 0
    %s11 = scalar_lea.sflag [#allocation3], 1
    %12 = vsyncpa %s11, 0
    loop: start=0, step=1, limit=4
    $region2: #{tpu_custom_call.1} parent=1 // loop_pre_header
      _
    $region3: #{tpu_custom_call.1} parent=1 // loop_header
      %s14 = sphi 0, %s18
      %p15 = scmp.ge.s32.totalorder %s14, 4
      %s21 = sphi 0, %s33
      %s22 = sphi 0, %s29
      %s23 = sphi 0, %s21
      %s24 = sphi 0, %s22
      %s25 = sphi 0, %s23
      %s26 = sphi 0, %s24
      %s38 = sphi 0, %s40
      %s41 = sphi 0, %s38
      %s42 = sphi 0, %s41
      %s58 = sphi 0, %s42
      %s64 = sphi 0, %s66
      %s67 = sphi 0, %s64
      %s68 = sphi 0, %s67
      %s84 = sphi 0, %s68
      %s90 = sphi 0, %s92
      %s93 = sphi 0, %s90
      %s94 = sphi 0, %s93
      %s110 = sphi 0, %s94
      %s116 = sphi 0, %s118
      %s119 = sphi 0, %s116
      %s120 = sphi 0, %s119
      %s136 = sphi 0, %s120
      %s140 = sphi 0, %s140
      %s142 = sphi 0, %s140
      %s143 = sphi 0, %s142
      %s157 = sphi 0, %s143
      %s165 = sphi 0, %s167
      %s168 = sphi 0, %s165
      %s169 = sphi 0, %s168
      %s185 = sphi 0, %s169
    $region4: #{tpu_custom_call.1} parent=1 // loop_header_branch
      %17 = sbr.rel (%p15) target = $region8
    $region5: #{tpu_custom_call.1} parent=1 // loop_body
      %s19 = ssub.s32 %s14, 1
      %s20 = ssub.s32 %s14, 2
      %s27 = sadd.s32 1, %s22
      %p28 = scmp.ge.s32.totalorder %s27, 1
      %s29 = scalar_select %p28, 0, %s27
      %s30 = sadd.s32 1, %s21
      %s31 = scalar_select %p28, %s30, %s21
      %p32 = scmp.ge.s32.totalorder %s31, 2
      %s33 = scalar_select %p32, 0, %s31
      %s34 = ssub.s32 %s21, %s33
      %s35 = ssub.s32 %s22, %s29
      %s36 = sor.u32 %s34, %s35
      %p37 = scmp.eq.s32.totalorder %s36, 0
      %s39 = sadd.s32 %s38, 1
      %s40 = scalar_select %p37, %s38, %s39
      %p43 = pneg %p37
      %p44 = scmp.eq.s32.totalorder %s14, 1
      %p45 = por %p43, %p44
      %p46 = scmp.ne.s32.totalorder %s38, %s41
      %p47 = scmp.eq.s32.totalorder %s14, 0
      %p48 = por %p46, %p47
      %p49 = scmp.ne.s32.totalorder %s38, %s41
      %p50 = scmp.eq.s32.totalorder %s19, 1
      %p51 = por %p49, %p50
      %p52 = scmp.ne.s32.totalorder %s41, %s42
      %p53 = scmp.eq.s32.totalorder %s19, 0
      %p54 = por %p52, %p53
      %p55 = scmp.ne.s32.totalorder %s41, %s42
      %p56 = scmp.eq.s32.totalorder %s20, 1
      %p57 = por %p55, %p56
      %p59 = scmp.ne.s32.totalorder %s42, %s58
      %p60 = scmp.eq.s32.totalorder %s20, 0
      %p61 = por %p59, %p60
      %s62 = ssub.s32 %s21, %s33
      %p63 = scmp.eq.s32.totalorder %s62, 0
      %s65 = sadd.s32 %s64, 1
      %s66 = scalar_select %p63, %s64, %s65
      %p69 = pneg %p63
      %p70 = scmp.eq.s32.totalorder %s14, 1
      %p71 = por %p69, %p70
      %p72 = scmp.ne.s32.totalorder %s64, %s67
      %p73 = scmp.eq.s32.totalorder %s14, 0
      %p74 = por %p72, %p73
      %p75 = scmp.ne.s32.totalorder %s64, %s67
      %p76 = scmp.eq.s32.totalorder %s19, 1
      %p77 = por %p75, %p76
      %p78 = scmp.ne.s32.totalorder %s67, %s68
      %p79 = scmp.eq.s32.totalorder %s19, 0
      %p80 = por %p78, %p79
      %p81 = scmp.ne.s32.totalorder %s67, %s68
      %p82 = scmp.eq.s32.totalorder %s20, 1
      %p83 = por %p81, %p82
      %p85 = scmp.ne.s32.totalorder %s68, %s84
      %p86 = scmp.eq.s32.totalorder %s20, 0
      %p87 = por %p85, %p86
      %s88 = ssub.s32 %s21, %s33
      %p89 = scmp.eq.s32.totalorder %s88, 0
      %s91 = sadd.s32 %s90, 1
      %s92 = scalar_select %p89, %s90, %s91
      %p95 = pneg %p89
      %p96 = scmp.eq.s32.totalorder %s14, 1
      %p97 = por %p95, %p96
      %p98 = scmp.ne.s32.totalorder %s90, %s93
      %p99 = scmp.eq.s32.totalorder %s14, 0
      %p100 = por %p98, %p99
      %p101 = scmp.ne.s32.totalorder %s90, %s93
      %p102 = scmp.eq.s32.totalorder %s19, 1
      %p103 = por %p101, %p102
      %p104 = scmp.ne.s32.totalorder %s93, %s94
      %p105 = scmp.eq.s32.totalorder %s19, 0
      %p106 = por %p104, %p105
      %p107 = scmp.ne.s32.totalorder %s93, %s94
      %p108 = scmp.eq.s32.totalorder %s20, 1
      %p109 = por %p107, %p108
      %p111 = scmp.ne.s32.totalorder %s94, %s110
      %p112 = scmp.eq.s32.totalorder %s20, 0
      %p113 = por %p111, %p112
      %s114 = ssub.s32 %s21, %s33
      %p115 = scmp.eq.s32.totalorder %s114, 0
      %s117 = sadd.s32 %s116, 1
      %s118 = scalar_select %p115, %s116, %s117
      %p121 = pneg %p115
      %p122 = scmp.eq.s32.totalorder %s14, 1
      %p123 = por %p121, %p122
      %p124 = scmp.ne.s32.totalorder %s116, %s119
      %p125 = scmp.eq.s32.totalorder %s14, 0
      %p126 = por %p124, %p125
      %p127 = scmp.ne.s32.totalorder %s116, %s119
      %p128 = scmp.eq.s32.totalorder %s19, 1
      %p129 = por %p127, %p128
      %p130 = scmp.ne.s32.totalorder %s119, %s120
      %p131 = scmp.eq.s32.totalorder %s19, 0
      %p132 = por %p130, %p131
      %p133 = scmp.ne.s32.totalorder %s119, %s120
      %p134 = scmp.eq.s32.totalorder %s20, 1
      %p135 = por %p133, %p134
      %p137 = scmp.ne.s32.totalorder %s120, %s136
      %p138 = scmp.eq.s32.totalorder %s20, 0
      %p139 = por %p137, %p138
      %s141 = sadd.s32 %s140, 1
      %p144 = scmp.eq.s32.totalorder %s14, 1
      %p145 = scmp.ne.s32.totalorder %s140, %s142
      %p146 = scmp.eq.s32.totalorder %s14, 0
      %p147 = por %p145, %p146
      %p148 = scmp.ne.s32.totalorder %s140, %s142
      %p149 = scmp.eq.s32.totalorder %s19, 1
      %p150 = por %p148, %p149
      %p151 = scmp.ne.s32.totalorder %s142, %s143
      %p152 = scmp.eq.s32.totalorder %s19, 0
      %p153 = por %p151, %p152
      %p154 = scmp.ne.s32.totalorder %s142, %s143
      %p155 = scmp.eq.s32.totalorder %s20, 1
      %p156 = por %p154, %p155
      %p158 = scmp.ne.s32.totalorder %s143, %s157
      %p159 = scmp.eq.s32.totalorder %s20, 0
      %p160 = por %p158, %p159
      %s161 = ssub.s32 %s21, %s33
      %s162 = ssub.s32 %s22, %s29
      %s163 = sor.u32 %s161, %s162
      %p164 = scmp.eq.s32.totalorder %s163, 0
      %s166 = sadd.s32 %s165, 1
      %s167 = scalar_select %p164, %s165, %s166
      %p170 = pneg %p164
      %p171 = scmp.eq.s32.totalorder %s14, 1
      %p172 = por %p170, %p171
      %p173 = scmp.ne.s32.totalorder %s165, %s168
      %p174 = scmp.eq.s32.totalorder %s14, 0
      %p175 = por %p173, %p174
      %p176 = scmp.ne.s32.totalorder %s165, %s168
      %p177 = scmp.eq.s32.totalorder %s19, 1
      %p178 = por %p176, %p177
      %p179 = scmp.ne.s32.totalorder %s168, %s169
      %p180 = scmp.eq.s32.totalorder %s19, 0
      %p181 = por %p179, %p180
      %p182 = scmp.ne.s32.totalorder %s168, %s169
      %p183 = scmp.eq.s32.totalorder %s20, 1
      %p184 = por %p182, %p183
      %p186 = scmp.ne.s32.totalorder %s169, %s185
      %p187 = scmp.eq.s32.totalorder %s20, 0
      %p188 = por %p186, %p187
      %p189 = scmp.le.s32.totalorder 1, %s14
      %p190 = scmp.lt.s32.totalorder %s14, 3
      %p191 = pnand %p189, %p190
      %p192 = pneg %p191
      // Predicated region
      $region9: #{tpu_custom_call.1} parent=5 // pred_check
        _
      $region10: #{tpu_custom_call.1} parent=5 // pred_check_branch
        %194 = sbr.rel (%p191) target = $region12
      $region11: #{tpu_custom_call.1} parent=5 // pred_region
        %s195 = ssub.s32 %s14, 1
        // Predicated region
        $region13: #{tpu_custom_call.1} parent=11 // pred_check
          %p196 = pneg %p153
        $region14: #{tpu_custom_call.1} parent=11 // pred_check_branch
          %198 = sbr.rel (%p196) target = $region16
        $region15: #{tpu_custom_call.1} parent=11 // pred_region
          _
        $region16: #{tpu_custom_call.1} parent=11 // pred_fallthru
          _
      $region12: #{tpu_custom_call.1} parent=5 // pred_fallthru
        _
      %p199 = scmp.lt.s32.totalorder %s14, 2
      // Predicated region
      $region17: #{tpu_custom_call.1} parent=5 // pred_check
        %p200 = pneg %p199
      $region18: #{tpu_custom_call.1} parent=5 // pred_check_branch
        %202 = sbr.rel (%p200) target = $region20
      $region19: #{tpu_custom_call.1} parent=5 // pred_region
        // Predicated region
        $region21: #{tpu_custom_call.1} parent=19 // pred_check
          %p203 = pneg %p48
        $region22: #{tpu_custom_call.1} parent=19 // pred_check_branch
          %205 = sbr.rel (%p203) target = $region24
        $region23: #{tpu_custom_call.1} parent=19 // pred_region
          %s206 = smul.u32 2, %s22
          %p207 = scmp.lt.s32.totalorder %s21, 1
          %s208 = scalar_select %p207, %s21, 1
          %p209 = scmp.lt.s32.totalorder %s206, 1
          %s210 = scalar_select %p209, %s206, 1
          %s211 = smul.addr %s208, 2
          %s212 = sadd.s32 %s210, %s211
          %s213 = smul.addr %s212, 4
          %s214 = scalar_lea.vmem %s0, %s213
          %s215 = smul.u32 2, %s22
        $region24: #{tpu_custom_call.1} parent=19 // pred_fallthru
          _
        // Predicated region
        $region25: #{tpu_custom_call.1} parent=19 // pred_check
          %p216 = pneg %p74
        $region26: #{tpu_custom_call.1} parent=19 // pred_check_branch
          %218 = sbr.rel (%p216) target = $region28
        $region27: #{tpu_custom_call.1} parent=19 // pred_region
          %p219 = scmp.lt.s32.totalorder %s21, 1
          %s220 = scalar_select %p219, %s21, 1
          %s221 = smul.addr %s220, 8
          %s222 = scalar_lea.vmem %s1, %s221
        $region28: #{tpu_custom_call.1} parent=19 // pred_fallthru
          _
        // Predicated region
        $region29: #{tpu_custom_call.1} parent=19 // pred_check
          %p223 = pneg %p100
        $region30: #{tpu_custom_call.1} parent=19 // pred_check_branch
          %225 = sbr.rel (%p223) target = $region32
        $region31: #{tpu_custom_call.1} parent=19 // pred_region
          %p226 = scmp.lt.s32.totalorder %s21, 1
          %s227 = scalar_select %p226, %s21, 1
          %s228 = smul.addr %s227, 8
          %s229 = scalar_lea.vmem %s2, %s228
        $region32: #{tpu_custom_call.1} parent=19 // pred_fallthru
          _
        // Predicated region
        $region33: #{tpu_custom_call.1} parent=19 // pred_check
          %p230 = pneg %p126
        $region34: #{tpu_custom_call.1} parent=19 // pred_check_branch
          %232 = sbr.rel (%p230) target = $region36
        $region35: #{tpu_custom_call.1} parent=19 // pred_region
          %p233 = scmp.lt.s32.totalorder %s21, 1
          %s234 = scalar_select %p233, %s21, 1
          %s235 = smul.addr %s234, 4
          %s236 = scalar_lea.vmem %s3, %s235
        $region36: #{tpu_custom_call.1} parent=19 // pred_fallthru
          _
      $region20: #{tpu_custom_call.1} parent=5 // pred_fallthru
        _
      %p237 = scmp.le.s32.totalorder 1, %s14
      %p238 = scmp.lt.s32.totalorder %s14, 3
      %p239 = pnand %p237, %p238
      %p240 = pneg %p239
      // Predicated region
      $region37: #{tpu_custom_call.1} parent=5 // pred_check
        _
      $region38: #{tpu_custom_call.1} parent=5 // pred_check_branch
        %242 = sbr.rel (%p239) target = $region40
      $region39: #{tpu_custom_call.1} parent=5 // pred_region
        %s243 = ssub.s32 %s14, 1
        %s244 = smul.u32 2, %s24
        %p245 = scmp.lt.s32.totalorder %s23, 1
        %s246 = scalar_select %p245, %s23, 1
        %p247 = scmp.lt.s32.totalorder %s244, 1
        %s248 = scalar_select %p247, %s244, 1
        %s249 = smul.addr %s246, 2
        %s250 = sadd.s32 %s248, %s249
        %s251 = smul.addr %s250, 4
        %s252 = scalar_lea.vmem %s0, %s251
        %p253 = pneg %p54
        %p254 = pneg %p51
        %p255 = scmp.lt.s32.totalorder %s23, 1
        %s256 = scalar_select %p255, %s23, 1
        %s257 = smul.addr %s256, 8
        %s258 = scalar_lea.vmem %s1, %s257
        %p259 = pneg %p80
        %p260 = pneg %p77
        %p261 = scmp.lt.s32.totalorder %s23, 1
        %s262 = scalar_select %p261, %s23, 1
        %s263 = smul.addr %s262, 8
        %s264 = scalar_lea.vmem %s2, %s263
        %p265 = pneg %p106
        %p266 = pneg %p103
        %p267 = scmp.lt.s32.totalorder %s23, 1
        %s268 = scalar_select %p267, %s23, 1
        %s269 = smul.addr %s268, 4
        %s270 = scalar_lea.vmem %s3, %s269
        %p271 = pneg %p132
        %p272 = pneg %p129
        %p273 = pneg %p153
        %p274 = pneg %p150
        %p275 = pneg %p181
        %p276 = pneg %p178
        %s277 = sand.u32 %s168, 1
        %s278 = scalar_lea.sflag [#allocation3], %s277
        %s279 = sand.u32 %s168, 1
        %s280 = smul.addr %s279, 8
        %s281 = scalar_lea.vmem [#allocation2], %s280
        %s282 = smul.u32 2, %s24
        %p283 = scmp.lt.s32.totalorder %s23, 1
        %s284 = scalar_select %p283, %s23, 1
        %p285 = scmp.lt.s32.totalorder %s282, 1
        %s286 = scalar_select %p285, %s282, 1
        %s287 = smul.addr %s284, 2
        %s288 = sadd.s32 %s286, %s287
        %s289 = smul.addr %s288, 4
        %s290 = scalar_lea.vmem %s0, %s289
        %s291 = smul.u32 2, %s24
        %p292 = scmp.lt.s32.totalorder %s23, 1
        %s293 = scalar_select %p292, %s23, 1
        %s294 = smul.addr %s293, 8
        %s295 = scalar_lea.vmem %s1, %s294
        %p296 = scmp.lt.s32.totalorder %s23, 1
        %s297 = scalar_select %p296, %s23, 1
        %s298 = smul.addr %s297, 8
        %s299 = scalar_lea.vmem %s2, %s298
        %p300 = scmp.lt.s32.totalorder %s23, 1
        %s301 = scalar_select %p300, %s23, 1
        %s302 = smul.addr %s301, 4
        %s303 = scalar_lea.vmem %s3, %s302
        %s304 = smul.u32 2, %s24
        %v305 = vld [vmem:[%s290] sm:$0xff]
        %v306 = vld [vmem:[%s295] sm:$0xff]
        %v307 = vld [vmem:[%s299] sm:$0xff]
        %v308 = vld [vmem:[%s303] sm:$0xf]
        %310 = vset.pattern.permute.xlu0 0
        %311 = vperm.xlu0 %310, %v306
        %v312 = vpop.permute.xlu0 %311
        %v315 = vlaneseq
        %v316 = vshrl.u32 %v315, 7
        %v317 = vsub.s32 0, %v316
        %v318 = vrot.slane %v305, %v317
        %v319 = vlaneseq
        %v320 = vshrl.u32 %v319, 7
        %v321 = vsub.s32 4, %v320
        %v322 = vrot.slane %v305, %v321
        %v325 = vlaneseq
        %v326 = vshrl.u32 %v325, 7
        %v327 = vsub.s32 0, %v326
        %v328 = vrot.slane %v318, %v327
        %v329 = vlaneseq
        %v330 = vshrl.u32 %v329, 7
        %v331 = vsub.s32 0, %v330
        %v332 = vrot.slane %v322, %v331
        %v333 = vmul.f32 %v312, %v328
        %v334 = vmul.f32 %v312, %v332
        %335 = vset.pattern.permute.xlu0 1
        %336 = vperm.xlu0 %335, %v306
        %v337 = vpop.permute.xlu0 %336
        %v339 = vlaneseq
        %v340 = vshrl.u32 %v339, 7
        %v341 = vsub.s32 1, %v340
        %v342 = vrot.slane %v305, %v341
        %v343 = vlaneseq
        %v344 = vshrl.u32 %v343, 7
        %v345 = vsub.s32 5, %v344
        %v346 = vrot.slane %v305, %v345
        %v349 = vlaneseq
        %v350 = vshrl.u32 %v349, 7
        %v351 = vsub.s32 1, %v350
        %v352 = vrot.slane %v342, %v351
        %v353 = vlaneseq
        %v354 = vshrl.u32 %v353, 7
        %v355 = vsub.s32 1, %v354
        %v356 = vrot.slane %v346, %v355
        %v357 = vmul.f32 %v337, %v352
        %v358 = vmul.f32 %v337, %v356
        %v359 = vadd.f32 %v333, %v357
        %v360 = vadd.f32 %v334, %v358
        %361 = vset.pattern.permute.xlu0 2
        %362 = vperm.xlu0 %361, %v306
        %v363 = vpop.permute.xlu0 %362
        %v365 = vlaneseq
        %v366 = vshrl.u32 %v365, 7
        %v367 = vsub.s32 2, %v366
        %v368 = vrot.slane %v305, %v367
        %v369 = vlaneseq
        %v370 = vshrl.u32 %v369, 7
        %v371 = vsub.s32 6, %v370
        %v372 = vrot.slane %v305, %v371
        %v375 = vlaneseq
        %v376 = vshrl.u32 %v375, 7
        %v377 = vsub.s32 2, %v376
        %v378 = vrot.slane %v368, %v377
        %v379 = vlaneseq
        %v380 = vshrl.u32 %v379, 7
        %v381 = vsub.s32 2, %v380
        %v382 = vrot.slane %v372, %v381
        %v383 = vmul.f32 %v363, %v378
        %v384 = vmul.f32 %v363, %v382
        %v385 = vadd.f32 %v359, %v383
        %v386 = vadd.f32 %v360, %v384
        %387 = vset.pattern.permute.xlu0 3
        %388 = vperm.xlu0 %387, %v306
        %v389 = vpop.permute.xlu0 %388
        %v391 = vlaneseq
        %v392 = vshrl.u32 %v391, 7
        %v393 = vsub.s32 3, %v392
        %v394 = vrot.slane %v305, %v393
        %v395 = vlaneseq
        %v396 = vshrl.u32 %v395, 7
        %v397 = vsub.s32 7, %v396
        %v398 = vrot.slane %v305, %v397
        %v401 = vlaneseq
        %v402 = vshrl.u32 %v401, 7
        %v403 = vsub.s32 3, %v402
        %v404 = vrot.slane %v394, %v403
        %v405 = vlaneseq
        %v406 = vshrl.u32 %v405, 7
        %v407 = vsub.s32 3, %v406
        %v408 = vrot.slane %v398, %v407
        %v409 = vmul.f32 %v389, %v404
        %v410 = vmul.f32 %v389, %v408
        %v411 = vadd.f32 %v385, %v409
        %v412 = vadd.f32 %v386, %v410
        %414 = vset.pattern.permute.xlu0 0
        %415 = vperm.xlu0 %414, %v307
        %v416 = vpop.permute.xlu0 %415
        %v418 = vadd.f32 %v411, %v416
        %v419 = vadd.f32 %v412, %v416
        %v420 = vrot.slane %v418, 4
        %v421 = vmax.f32 %v418, %v420
        %v422 = vrot.slane %v421, 2
        %v423 = vmax.f32 %v421, %v422
        %v424 = vrot.slane %v423, 1
        %v425 = vmax.f32 %v423, %v424
        %v426 = vrot.slane %v419, 4
        %v427 = vmax.f32 %v419, %v426
        %v428 = vrot.slane %v427, 2
        %v429 = vmax.f32 %v427, %v428
        %v430 = vrot.slane %v429, 1
        %v431 = vmax.f32 %v429, %v430
        %v432 = vsub.f32 %v418, %v425
        %v433 = vsub.f32 %v419, %v431
        %v434 = vmul.f32 %v432, 1.442695
        %v435 = vpow.pop %v434
        %v436 = vmul.f32 %v433, 1.442695
        %v437 = vpow.pop %v436
        %v438 = vrot.slane %v435, 4
        %v439 = vadd.f32 %v435, %v438
        %v440 = vrot.slane %v439, 2
        %v441 = vadd.f32 %v439, %v440
        %v442 = vrot.slane %v441, 1
        %v443 = vadd.f32 %v441, %v442
        %v444 = vrot.slane %v437, 4
        %v445 = vadd.f32 %v437, %v444
        %v446 = vrot.slane %v445, 2
        %v447 = vadd.f32 %v445, %v446
        %v448 = vrot.slane %v447, 1
        %v449 = vadd.f32 %v447, %v448
        %451 = vset.pattern.permute.xlu0 0
        %452 = vperm.xlu0 %451, %v308
        %v453 = vpop.permute.xlu0 %452
        %v455 = vlaneseq
        %v456 = vshrl.u32 %v455, 7
        %v457 = vsub.s32 0, %v456
        %v458 = vrot.slane %v435, %v457
        %v459 = vlaneseq
        %v460 = vshrl.u32 %v459, 7
        %v461 = vsub.s32 0, %v460
        %v462 = vrot.slane %v437, %v461
        %v463 = vmul.f32 %v453, %v458
        %v464 = vmul.f32 %v453, %v462
        %465 = vset.pattern.permute.xlu0 1
        %466 = vperm.xlu0 %465, %v308
        %v467 = vpop.permute.xlu0 %466
        %v469 = vlaneseq
        %v470 = vshrl.u32 %v469, 7
        %v471 = vsub.s32 1, %v470
        %v472 = vrot.slane %v435, %v471
        %v473 = vlaneseq
        %v474 = vshrl.u32 %v473, 7
        %v475 = vsub.s32 1, %v474
        %v476 = vrot.slane %v437, %v475
        %v477 = vmul.f32 %v467, %v472
        %v478 = vmul.f32 %v467, %v476
        %v479 = vadd.f32 %v463, %v477
        %v480 = vadd.f32 %v464, %v478
        %481 = vset.pattern.permute.xlu0 2
        %482 = vperm.xlu0 %481, %v308
        %v483 = vpop.permute.xlu0 %482
        %v485 = vlaneseq
        %v486 = vshrl.u32 %v485, 7
        %v487 = vsub.s32 2, %v486
        %v488 = vrot.slane %v435, %v487
        %v489 = vlaneseq
        %v490 = vshrl.u32 %v489, 7
        %v491 = vsub.s32 2, %v490
        %v492 = vrot.slane %v437, %v491
        %v493 = vmul.f32 %v483, %v488
        %v494 = vmul.f32 %v483, %v492
        %v495 = vadd.f32 %v479, %v493
        %v496 = vadd.f32 %v480, %v494
        %497 = vset.pattern.permute.xlu0 3
        %498 = vperm.xlu0 %497, %v308
        %v499 = vpop.permute.xlu0 %498
        %v501 = vlaneseq
        %v502 = vshrl.u32 %v501, 7
        %v503 = vsub.s32 3, %v502
        %v504 = vrot.slane %v435, %v503
        %v505 = vlaneseq
        %v506 = vshrl.u32 %v505, 7
        %v507 = vsub.s32 3, %v506
        %v508 = vrot.slane %v437, %v507
        %v509 = vmul.f32 %v499, %v504
        %v510 = vmul.f32 %v499, %v508
        %v511 = vadd.f32 %v495, %v509
        %v512 = vadd.f32 %v496, %v510
        %513 = vset.pattern.permute.xlu0 4
        %514 = vperm.xlu0 %513, %v308
        %v515 = vpop.permute.xlu0 %514
        %v517 = vlaneseq
        %v518 = vshrl.u32 %v517, 7
        %v519 = vsub.s32 4, %v518
        %v520 = vrot.slane %v435, %v519
        %v521 = vlaneseq
        %v522 = vshrl.u32 %v521, 7
        %v523 = vsub.s32 4, %v522
        %v524 = vrot.slane %v437, %v523
        %v525 = vmul.f32 %v515, %v520
        %v526 = vmul.f32 %v515, %v524
        %v527 = vadd.f32 %v511, %v525
        %v528 = vadd.f32 %v512, %v526
        %529 = vset.pattern.permute.xlu0 5
        %530 = vperm.xlu0 %529, %v308
        %v531 = vpop.permute.xlu0 %530
        %v533 = vlaneseq
        %v534 = vshrl.u32 %v533, 7
        %v535 = vsub.s32 5, %v534
        %v536 = vrot.slane %v435, %v535
        %v537 = vlaneseq
        %v538 = vshrl.u32 %v537, 7
        %v539 = vsub.s32 5, %v538
        %v540 = vrot.slane %v437, %v539
        %v541 = vmul.f32 %v531, %v536
        %v542 = vmul.f32 %v531, %v540
        %v543 = vadd.f32 %v527, %v541
        %v544 = vadd.f32 %v528, %v542
        %545 = vset.pattern.permute.xlu0 6
        %546 = vperm.xlu0 %545, %v308
        %v547 = vpop.permute.xlu0 %546
        %v549 = vlaneseq
        %v550 = vshrl.u32 %v549, 7
        %v551 = vsub.s32 6, %v550
        %v552 = vrot.slane %v435, %v551
        %v553 = vlaneseq
        %v554 = vshrl.u32 %v553, 7
        %v555 = vsub.s32 6, %v554
        %v556 = vrot.slane %v437, %v555
        %v557 = vmul.f32 %v547, %v552
        %v558 = vmul.f32 %v547, %v556
        %v559 = vadd.f32 %v543, %v557
        %v560 = vadd.f32 %v544, %v558
        %561 = vset.pattern.permute.xlu0 7
        %562 = vperm.xlu0 %561, %v308
        %v563 = vpop.permute.xlu0 %562
        %v565 = vlaneseq
        %v566 = vshrl.u32 %v565, 7
        %v567 = vsub.s32 7, %v566
        %v568 = vrot.slane %v435, %v567
        %v569 = vlaneseq
        %v570 = vshrl.u32 %v569, 7
        %v571 = vsub.s32 7, %v570
        %v572 = vrot.slane %v437, %v571
        %v573 = vmul.f32 %v563, %v568
        %v574 = vmul.f32 %v563, %v572
        %v575 = vadd.f32 %v559, %v573
        %v576 = vadd.f32 %v560, %v574
        %v577 = vrcp.pop %v443
        %v578 = vrcp.pop %v449
        %v579 = vmul.f32 %v575, %v577
        %v580 = vmul.f32 %v576, %v578
        %v581 = vld [vmem:[%s4] sm:$0xf]
        %583 = vset.pattern.permute.xlu0 0
        %584 = vperm.xlu0 %583, %v581
        %v585 = vpop.permute.xlu0 %584
        %v587 = vadd.f32 %v579, %v585
        %v588 = vadd.f32 %v580, %v585
        %v589 = vcombine.high %v305, %v305
        %v591 = vadd.f32 %v587, %v305
        %v592 = vadd.f32 %v588, %v589
        %v595 = vcombine.low %v591, %v592
        %597 = vst [vmem:[%s281] sm:$0xff] %v595
        %s598 = sand.u32 %s168, 1
        %s599 = scalar_lea.sflag [#allocation3], %s598
        %s600 = sand.u32 %s168, 1
        %s601 = smul.addr %s600, 8
        %s602 = scalar_lea.vmem [#allocation2], %s601
        // Predicated region
        $region41: #{tpu_custom_call.1} parent=39 // pred_check
          %p603 = pneg %p178
        $region42: #{tpu_custom_call.1} parent=39 // pred_check_branch
          %605 = sbr.rel (%p603) target = $region44
        $region43: #{tpu_custom_call.1} parent=39 // pred_region
          %s606 = smul.u32 2, %s24
          %s608 = ssub.s32 128, 128
          %609 = vsyncadd %s599, %s608
          %s610 = smul.addr %s23, 2
          %s611 = sadd.s32 %s606, %s610
          %s612 = smul.addr %s611, 64
          %s613 = scalar_lea.hbm %s5, %s612
          %s615 = sshll.u32 %s602, 4
          %s616 = int_to_ptr.vmem [resolvable:$true] %s615
          %618 = dma.vmem_to_hbm [thread:$0]  %s616, 128, %s613, %s599
        $region44: #{tpu_custom_call.1} parent=39 // pred_fallthru
          _
      $region40: #{tpu_custom_call.1} parent=5 // pred_fallthru
        _
      %p619 = scmp.le.s32.totalorder 2, %s14
      // Predicated region
      $region45: #{tpu_custom_call.1} parent=5 // pred_check
        %p620 = pneg %p619
      $region46: #{tpu_custom_call.1} parent=5 // pred_check_branch
        %622 = sbr.rel (%p620) target = $region48
      $region47: #{tpu_custom_call.1} parent=5 // pred_region
        %s623 = ssub.s32 %s14, 2
        // Predicated region
        $region49: #{tpu_custom_call.1} parent=47 // pred_check
          %p624 = pneg %p184
        $region50: #{tpu_custom_call.1} parent=47 // pred_check_branch
          %626 = sbr.rel (%p624) target = $region52
        $region51: #{tpu_custom_call.1} parent=47 // pred_region
          %s627 = sand.u32 %s169, 1
          %s628 = scalar_lea.sflag [#allocation3], %s627
          %s629 = sand.u32 %s169, 1
          %s630 = smul.addr %s629, 8
          %s631 = scalar_lea.vmem [#allocation2], %s630
          %632 = dma.done %s628, 128
        $region52: #{tpu_custom_call.1} parent=47 // pred_fallthru
          _
      $region48: #{tpu_custom_call.1} parent=5 // pred_fallthru
        _
    $region6: #{tpu_custom_call.1} parent=1 // loop_footer
      %s18 = sadd.s32 1, %s14
    $region7: #{tpu_custom_call.1} parent=1 // loop_footer_branch
      %13 = sbr.rel target = $region3
    $region8: #{tpu_custom_call.1} parent=1 // loop_exit
      _
    %633 = vsyncpa [#allocation3], 1
    %s634 = scalar_lea.sflag [#allocation3], 1
    %635 = vsyncpa %s634, 1

</llo_original>
